<compile_context>
chip_gen: v6e
topology: v6e:2x2x1
jax: 0.10.0
libtpu: 0.0.40
codegen_flags: <defaults>
</compile_context>

<pallas_src>
import functools
import math

import numpy as np
import jax
import jax.numpy as jnp
from jax import lax
from jax.experimental import pallas as pl
from jax.experimental.pallas import tpu as pltpu


def _round_up(x, m):
    return ((x + m - 1) // m) * m


def _choose_cg(Cin, H):
    """Images per spectral grid step.

    cg must divide Cin (so the gate/pos dedupe over batch is exact), cg*H must
    be a multiple of 8 (sublane constraint), and we want the smallest such cg
    with cg*H >= 128 (MXU fill) -- kron(I_cg, FH) costs cg x extra FLOPs, so
    never grow cg past what is needed.  H >= 128 therefore gives cg = 1.
    """
    divisors = [d for d in range(1, Cin + 1) if Cin % d == 0]
    valid = [d for d in divisors if (d * H) % 8 == 0]
    if not valid:
        raise ValueError(f"no divisor of Cin={Cin} makes cg*H a multiple of 8 (H={H})")
    big = [d for d in valid if d * H >= 128]
    return min(big) if big else max(valid)


# ----------------------------------------------------------------------------
# Precomputed constants (hoisted out of the forward pass)
# ----------------------------------------------------------------------------
def make_dft_constants(H, W, cg):
    """DFT matrices for ortho rfft2/irfft2, packed for the spectral kernel.

    Frequency axis is padded Wf -> Wfp = round_up(Wf, 128); padded lanes stay
    exactly zero through the pipeline.  Matrices are bf16 (MXU inputs, f32 acc).
    """
    Wf = W // 2 + 1
    Wfp = _round_up(Wf, 128)

    n = np.arange(H)
    FH = np.exp(-2j * np.pi * np.outer(n, n) / H) / np.sqrt(H)          # (H, H), symmetric
    FHD = np.kron(np.eye(cg), FH)                                       # block-diag over cg images

    w_idx = np.arange(W)
    k = np.arange(Wf)
    CW = np.exp(-2j * np.pi * np.outer(w_idx, k) / W) / np.sqrt(W)      # (W, Wf)
    alpha = np.full((Wf,), 2.0)
    alpha[0] = 1.0
    if W % 2 == 0:
        alpha[-1] = 1.0
    G = alpha[:, None] * np.exp(2j * np.pi * np.outer(k, w_idx) / W) / np.sqrt(W)  # (Wf, W)

    CWp = np.zeros((W, Wfp), np.complex128); CWp[:, :Wf] = CW
    Gp = np.zeros((Wfp, W), np.complex128); Gp[:Wf, :] = G

    bf16 = lambda a: jnp.asarray(np.ascontiguousarray(a), jnp.bfloat16)
    cwri = bf16(np.concatenate([CWp.real, CWp.imag], axis=1))           # (W, 2*Wfp)
    fhdr = bf16(FHD.real)                                               # (cg*H, cg*H)
    fhdi = bf16(FHD.imag)
    g2 = bf16(np.concatenate([Gp.real, -Gp.imag], axis=0))              # (2*Wfp, W)
    return cwri, fhdr, fhdi, g2, Wfp


def init_stem_params(key, cin, cout, h):
    wf = h // 2 + 1
    k1, k2, k3, k4 = jax.random.split(key, 4)
    pos = 0.02 * jax.random.truncated_normal(k1, -2.0, 2.0, (1, cin, h, h), jnp.float32)
    complex_weight = 0.02 * jax.random.truncated_normal(
        k2, -2.0, 2.0, (h, wf, cin, 2), jnp.float32)
    fan_in = cin * 4 * 4
    bound = 1.0 / np.sqrt(fan_in)
    conv_w = jax.random.uniform(k3, (cout, cin, 4, 4), jnp.float32, -bound, bound)
    conv_b = jax.random.uniform(k4, (cout,), jnp.float32, -bound, bound)
    return dict(pos=pos, complex_weight=complex_weight,
                conv_w=conv_w, conv_b=conv_b,
                gamma=jnp.ones((cout,), jnp.float32),
                beta=jnp.zeros((cout,), jnp.float32))


def make_stem_constants(params, B, Cin, Cout, H, W):
    """Build (once) every kernel operand that does not depend on x."""
    del B  # gate/pos are no longer broadcast over batch (deduped via the grid)
    cg = _choose_cg(Cin, H)
    assert (cg * H) % 8 == 0 and Cin % cg == 0
    Wf = W // 2 + 1
    cwri, fhdr, fhdi, g2, Wfp = make_dft_constants(H, W, cg)

    # per-channel complex gate, laid out as rows (c, h) with freq padded to Wfp
    cw = params["complex_weight"]                                        # (H, Wf, Cin, 2)
    wr = jnp.pad(jnp.transpose(cw[..., 0], (2, 0, 1)), ((0, 0), (0, 0), (0, Wfp - Wf)))
    wi = jnp.pad(jnp.transpose(cw[..., 1], (2, 0, 1)), ((0, 0), (0, 0), (0, Wfp - Wf)))
    wr2 = wr.reshape(Cin * H, Wfp)                                       # no B broadcast
    wi2 = wi.reshape(Cin * H, Wfp)
    pos2 = params["pos"].reshape(Cin * H, W)                             # no B broadcast

    # 4x4/stride-4 conv as a patch matmul; Cout padded to a lane-dense 128.
    # NOTE: the conv bias is mathematically absorbed by training-mode BatchNorm
    # (the per-channel batch mean contains it), so it is dropped from the
    # compute path -> BN moments are bias-free (no cancellation, no masking).
    K = Cin * 16
    Coutp = _round_up(Cout, 128)
    wmat = params["conv_w"].reshape(Cout, K).T                           # (K, Cout)
    wmat = jnp.pad(wmat, ((0, 0), (0, Coutp - Cout))).astype(jnp.bfloat16)
    gamma = jnp.pad(params["gamma"], (0, Coutp - Cout)).reshape(1, Coutp)
    beta = jnp.pad(params["beta"], (0, Coutp - Cout)).reshape(1, Coutp)

    consts = dict(pos2=pos2, wr2=wr2, wi2=wi2, cwri=cwri, fhdr=fhdr, fhdi=fhdi,
                  g2=g2, wmat=wmat, gamma=gamma, beta=beta)
    dims = dict(cg=cg, Wfp=Wfp, Coutp=Coutp)
    return consts, dims


# ----------------------------------------------------------------------------
# Kernel 1: spectral gating (rfft2 -> complex gate -> irfft2) as 6 MXU matmuls
# ----------------------------------------------------------------------------
def _spectral_kernel(wfp, x_ref, pos_ref, wr_ref, wi_ref,
                     cwri_ref, fhdr_ref, fhdi_ref, g2_ref, o_ref):
    f32 = jnp.float32
    bf16 = jnp.bfloat16

    xb = (x_ref[...] + pos_ref[...]).astype(bf16)                       # (M, W)

    # rfft along W: real|imag halves come out of a single matmul (cwri = [CWr|CWi])
    ari = jnp.dot(xb, cwri_ref[...], preferred_element_type=f32)        # (M, 2*Wfp)

    # forward FFT along H: block-diagonal DFT over the cg stacked images
    ab = ari.astype(bf16)
    pr = jnp.dot(fhdr_ref[...], ab, preferred_element_type=f32)
    pi = jnp.dot(fhdi_ref[...], ab, preferred_element_type=f32)
    xr = pr[:, :wfp] - pi[:, wfp:]
    xi = pr[:, wfp:] + pi[:, :wfp]

    # per-channel complex gate (kept in f32; v5e has no bf16 VPU)
    wr = wr_ref[...]
    wi = wi_ref[...]
    yr = xr * wr - xi * wi
    yi = xr * wi + xi * wr

    # inverse FFT along H (inverse = conj(FH); FH is symmetric)
    q = jnp.concatenate([yr, yi], axis=1).astype(bf16)                  # (M, 2*Wfp)
    rr = jnp.dot(fhdr_ref[...], q, preferred_element_type=f32)
    ri = jnp.dot(fhdi_ref[...], q, preferred_element_type=f32)
    zr = rr[:, :wfp] + ri[:, wfp:]
    zi = rr[:, wfp:] - ri[:, :wfp]

    # irfft along W: out = Re(Z @ G) with the Hermitian fold baked into g2
    zri = jnp.concatenate([zr, zi], axis=1).astype(bf16)                # (M, 2*Wfp)
    o_ref[...] = jnp.dot(zri, g2_ref[...],
                         preferred_element_type=f32).astype(o_ref.dtype)  # (M, W) bf16


def spectral_gating(x2, pos2, wr2, wi2, cwri, fhdr, fhdi, g2,
                    *, B, Cin, cg, H, W, Wfp):
    BCH = x2.shape[0]
    M = cg * H
    ncg = Cin // cg
    assert BCH == B * Cin * H
    kern = functools.partial(_spectral_kernel, Wfp)
    # 2-D grid: channel-group outer, batch innermost -> gate/pos block indices
    # are constant over the inner loop, so Pallas fetches them once per group.
    return pl.pallas_call(
        kern,
        out_shape=jax.ShapeDtypeStruct((BCH, W), jnp.bfloat16),
        grid=(ncg, B),
        in_specs=[
            pl.BlockSpec((M, W), lambda g, b: (b * ncg + g, 0)),   # x rows (b, c, h)
            pl.BlockSpec((M, W), lambda g, b: (g, 0)),             # pos embed (shared over b)
            pl.BlockSpec((M, Wfp), lambda g, b: (g, 0)),           # gate real (shared over b)
            pl.BlockSpec((M, Wfp), lambda g, b: (g, 0)),           # gate imag (shared over b)
            pl.BlockSpec((W, 2 * Wfp), lambda g, b: (0, 0)),       # rfft-W matrix [CWr|CWi]
            pl.BlockSpec((M, M), lambda g, b: (0, 0)),             # block-diag FH real
            pl.BlockSpec((M, M), lambda g, b: (0, 0)),             # block-diag FH imag
            pl.BlockSpec((2 * Wfp, W), lambda g, b: (0, 0)),       # irfft-W matrix [Gr;-Gi]
        ],
        out_specs=pl.BlockSpec((M, W), lambda g, b: (b * ncg + g, 0)),
        compiler_params=pltpu.CompilerParams(
            dimension_semantics=("parallel", "parallel")),
    )(x2, pos2, wr2, wi2, cwri, fhdr, fhdi, g2)


# ----------------------------------------------------------------------------
# Kernel 2a: row-tiled bf16 patch matmul + per-tile BN partial sum/sumsq
# ----------------------------------------------------------------------------
def _conv_stats_kernel(p_ref, w_ref, z_ref, stats_ref):
    # f32 MXU accumulator; moments are taken from it before the bf16 downcast.
    acc = jnp.dot(p_ref[...], w_ref[...], preferred_element_type=jnp.float32)
    z_ref[...] = acc.astype(z_ref.dtype)                                # (tm, Coutp) bf16
    # Zero-padded patch rows produce exactly-zero acc rows (no bias is added),
    # so they contribute nothing to the moments: no masking needed.
    s1 = jnp.sum(acc, axis=0, keepdims=True)                            # (1, Coutp)
    s2 = jnp.sum(acc * acc, axis=0, keepdims=True)                      # (1, Coutp)
    stats_ref[...] = jnp.concatenate([s1, s2], axis=0)[None]            # (1, 2, Coutp)


def conv_stats(patches_p, wmat, *, tm):
    npad, K = patches_p.shape
    coutp = wmat.shape[1]
    ntiles = npad // tm
    return pl.pallas_call(
        _conv_stats_kernel,
        out_shape=(jax.ShapeDtypeStruct((npad, coutp), jnp.bfloat16),
                   jax.ShapeDtypeStruct((ntiles, 2, coutp), jnp.float32)),
        grid=(ntiles,),
        in_specs=[pl.BlockSpec((tm, K), lambda t: (t, 0)),
                  pl.BlockSpec((K, coutp), lambda t: (0, 0))],
        out_specs=[pl.BlockSpec((tm, coutp), lambda t: (t, 0)),
                   pl.BlockSpec((1, 2, coutp), lambda t: (t, 0, 0))],
        compiler_params=pltpu.CompilerParams(
            dimension_semantics=("parallel",)),       # per-tile partials: no race
    )(patches_p, wmat)


# ----------------------------------------------------------------------------
# Kernel 2b: apply the (global) BatchNorm affine, row-tiled and parallel
# ----------------------------------------------------------------------------
def _bn_apply_kernel(z_ref, scale_ref, shift_ref, o_ref):
    o_ref[...] = z_ref[...].astype(jnp.float32) * scale_ref[...] + shift_ref[...]


def bn_apply(z, scale, shift, *, tm):
    npad, coutp = z.shape
    return pl.pallas_call(
        _bn_apply_kernel,
        out_shape=jax.ShapeDtypeStruct((npad, coutp), jnp.float32),
        grid=(npad // tm,),
        in_specs=[pl.BlockSpec((tm, coutp), lambda t: (t, 0)),
                  pl.BlockSpec((1, coutp), lambda t: (0, 0)),
                  pl.BlockSpec((1, coutp), lambda t: (0, 0))],
        out_specs=pl.BlockSpec((tm, coutp), lambda t: (t, 0)),
        compiler_params=pltpu.CompilerParams(
            dimension_semantics=("parallel",)),
    )(z, scale, shift)


# ----------------------------------------------------------------------------
# Forward wrapper
# ----------------------------------------------------------------------------
def build_stem_forward(B, Cin, Cout, H, W, dims, spect=True):
    cg, Wfp = dims["cg"], dims["Wfp"]
    Ho, Wo = H // 4, W // 4
    N = B * Ho * Wo
    K = Cin * 16
    # HBM-bound kernels: big tiles amortize per-step overhead (sweep 1024-2048).
    tm = 1024 if N >= 1024 else _round_up(max(N, 8), 8)
    Npad = _round_up(N, tm)

    @jax.jit
    def fwd(x, consts):
        x = x.astype(jnp.float32)
        x2 = x.reshape(B * Cin * H, W)
        if spect:
            y2 = spectral_gating(x2, consts["pos2"], consts["wr2"], consts["wi2"],
                                 consts["cwri"], consts["fhdr"], consts["fhdi"],
                                 consts["g2"], B=B, Cin=Cin, cg=cg, H=H, W=W, Wfp=Wfp)
        else:
            y2 = x2
        y = y2.astype(jnp.bfloat16).reshape(B, Cin, H, W)

        # TODO(synk): fuse this im2col rearrangement into kernel 2a to remove
        # the remaining (now bf16) full-tensor HBM roundtrip.
        patches = (y.reshape(B, Cin, Ho, 4, Wo, 4)
                     .transpose(0, 2, 4, 1, 3, 5)
                     .reshape(N, K))
        patches = jnp.pad(patches, ((0, Npad - N), (0, 0)))

        z, stats = conv_stats(patches, consts["wmat"], tm=tm)           # z: bf16, no bias

        # global training-mode BatchNorm statistics from bias-free (shifted)
        # per-tile partial moments; the conv bias cancels inside BN exactly.
        sums = jnp.sum(stats, axis=0)                                   # (2, Coutp)
        mean_c = sums[0:1] / N
        var = sums[1:2] / N - mean_c * mean_c                           # biased variance
        inv = lax.rsqrt(var + 1e-5)
        scale = consts["gamma"] * inv
        shift = consts["beta"] - mean_c * scale

        out = bn_apply(z, scale, shift, tm=tm)                          # (Npad, Coutp) f32
        out = out[:N, :Cout].reshape(B, Ho, Wo, Cout).transpose(0, 3, 1, 2)
        return out

    return fwd


# ----------------------------------------------------------------------------
# Pure-JAX reference (jnp.fft + lax.conv + batch-stat BN) for validation
# ----------------------------------------------------------------------------
def stem_reference(x, params):
    B, Cin, H, W = x.shape
    xp = (x + params["pos"]).astype(jnp.float32)
    xc = jnp.transpose(xp, (0, 2, 3, 1))
    xf = jnp.fft.rfft2(xc, axes=(1, 2), norm="ortho")
    w = params["complex_weight"][..., 0] + 1j * params["complex_weight"][..., 1]
    y = jnp.fft.irfft2(xf * w, s=(H, W), axes=(1, 2), norm="ortho")
    y = jnp.transpose(y, (0, 3, 1, 2))
    z = lax.conv_general_dilated(
        y, params["conv_w"], (4, 4), "VALID",
        dimension_numbers=("NCHW", "OIHW", "NCHW"))
    z = z + params["conv_b"][None, :, None, None]
    mean = jnp.mean(z, axis=(0, 2, 3), keepdims=True)
    var = jnp.mean(jnp.square(z - mean), axis=(0, 2, 3), keepdims=True)
    zn = (z - mean) / jnp.sqrt(var + 1e-5)
    return zn * params["gamma"][None, :, None, None] + params["beta"][None, :, None, None]


if __name__ == "__main__":
    B, Cin, Cout, H = 2, 4, 8, 16            # spect Stem: input is (B, Cin, H, H)
    key = jax.random.PRNGKey(0)
    kx, kp = jax.random.split(key)
    params = init_stem_params(kp, Cin, Cout, H)
    x = jax.random.normal(kx, (B, Cin, H, H), jnp.float32)

    consts, dims = make_stem_constants(params, B, Cin, Cout, H, H)
    fwd = build_stem_forward(B, Cin, Cout, H, H, dims, spect=True)

    out = jax.block_until_ready(fwd(x, consts))
    ref = jax.block_until_ready(stem_reference(x, params))

    assert out.shape == (B, Cout, H // 4, H // 4), out.shape
    assert bool(jnp.all(jnp.isfinite(out)))
    err = float(jnp.max(jnp.abs(out - ref)))
    assert err < 5e-2, f"mismatch vs. JAX reference: {err}"
    print("KERNEL_OK")
</pallas_src>

<mosaic_0001>
module attributes {stable_mosaic.version = 11 : i64} {
  func.func @_spectral_kernel(%arg0: i32, %arg1: i32, %arg2: memref<64x16xf32, #tpu.memory_space<vmem>>, %arg3: memref<64x16xf32, #tpu.memory_space<vmem>>, %arg4: memref<64x128xf32, #tpu.memory_space<vmem>>, %arg5: memref<64x128xf32, #tpu.memory_space<vmem>>, %arg6: memref<16x256xbf16, #tpu.memory_space<vmem>>, %arg7: memref<64x64xbf16, #tpu.memory_space<vmem>>, %arg8: memref<64x64xbf16, #tpu.memory_space<vmem>>, %arg9: memref<256x16xbf16, #tpu.memory_space<vmem>>, %arg10: memref<64x16xbf16, #tpu.memory_space<vmem>>) attributes {dimension_semantics = [#tpu.dimension_semantics<parallel>, #tpu.dimension_semantics<parallel>], iteration_bounds = array<i64: 1, 2>, scalar_prefetch = 0 : i64, scratch_operands = 0 : i64, tpu.core_type = #tpu.core_type<tc>, window_params = [{transform_indices = @transform_0, window_bounds = array<i64: 64, 16>}, {transform_indices = @transform_1, window_bounds = array<i64: 64, 16>}, {transform_indices = @transform_2, window_bounds = array<i64: 64, 128>}, {transform_indices = @transform_3, window_bounds = array<i64: 64, 128>}, {pipeline_mode = #tpu.pipeline_mode<synchronous>, transform_indices = @transform_4, window_bounds = array<i64: 16, 256>}, {pipeline_mode = #tpu.pipeline_mode<synchronous>, transform_indices = @transform_5, window_bounds = array<i64: 64, 64>}, {pipeline_mode = #tpu.pipeline_mode<synchronous>, transform_indices = @transform_6, window_bounds = array<i64: 64, 64>}, {pipeline_mode = #tpu.pipeline_mode<synchronous>, transform_indices = @transform_7, window_bounds = array<i64: 256, 16>}, {transform_indices = @transform_8, window_bounds = array<i64: 64, 16>}]} {
    %c0 = arith.constant 0 : index
    %c0_0 = arith.constant 0 : index
    %0 = vector.load %arg2[%c0, %c0_0] : memref<64x16xf32, #tpu.memory_space<vmem>>, vector<64x16xf32>
    %c0_1 = arith.constant 0 : index
    %c0_2 = arith.constant 0 : index
    %1 = vector.load %arg3[%c0_1, %c0_2] : memref<64x16xf32, #tpu.memory_space<vmem>>, vector<64x16xf32>
    %2 = arith.addf %0, %1 : vector<64x16xf32>
    %3 = arith.truncf %2 : vector<64x16xf32> to vector<64x16xbf16>
    %c0_3 = arith.constant 0 : index
    %c0_4 = arith.constant 0 : index
    %4 = vector.load %arg6[%c0_3, %c0_4] : memref<16x256xbf16, #tpu.memory_space<vmem>>, vector<16x256xbf16>
    %cst = arith.constant dense<0.000000e+00> : vector<64x256xf32>
    %5 = tpu.matmul %3, %4, %cst {dimension_numbers = #tpu.dot_dimension_numbers<[1], [0], [0], [1], [0, 0, 1, 1], [], []>} : vector<64x16xbf16>, vector<16x256xbf16>, vector<64x256xf32> -> vector<64x256xf32>
    %6 = arith.truncf %5 : vector<64x256xf32> to vector<64x256xbf16>
    %c0_5 = arith.constant 0 : index
    %c0_6 = arith.constant 0 : index
    %7 = vector.load %arg7[%c0_5, %c0_6] : memref<64x64xbf16, #tpu.memory_space<vmem>>, vector<64x64xbf16>
    %cst_7 = arith.constant dense<0.000000e+00> : vector<64x256xf32>
    %8 = tpu.matmul %7, %6, %cst_7 {dimension_numbers = #tpu.dot_dimension_numbers<[1], [0], [0], [1], [0, 0, 1, 1], [], []>} : vector<64x64xbf16>, vector<64x256xbf16>, vector<64x256xf32> -> vector<64x256xf32>
    %c0_8 = arith.constant 0 : index
    %c0_9 = arith.constant 0 : index
    %9 = vector.load %arg8[%c0_8, %c0_9] : memref<64x64xbf16, #tpu.memory_space<vmem>>, vector<64x64xbf16>
    %cst_10 = arith.constant dense<0.000000e+00> : vector<64x256xf32>
    %10 = tpu.matmul %9, %6, %cst_10 {dimension_numbers = #tpu.dot_dimension_numbers<[1], [0], [0], [1], [0, 0, 1, 1], [], []>} : vector<64x64xbf16>, vector<64x256xbf16>, vector<64x256xf32> -> vector<64x256xf32>
    %11 = vector.extract_strided_slice %8 {offsets = [0, 0], sizes = [64, 128], strides = [1, 1]} : vector<64x256xf32> to vector<64x128xf32>
    %12 = vector.extract_strided_slice %10 {offsets = [0, 128], sizes = [64, 128], strides = [1, 1]} : vector<64x256xf32> to vector<64x128xf32>
    %13 = arith.subf %11, %12 : vector<64x128xf32>
    %14 = vector.extract_strided_slice %8 {offsets = [0, 128], sizes = [64, 128], strides = [1, 1]} : vector<64x256xf32> to vector<64x128xf32>
    %15 = vector.extract_strided_slice %10 {offsets = [0, 0], sizes = [64, 128], strides = [1, 1]} : vector<64x256xf32> to vector<64x128xf32>
    %16 = arith.addf %14, %15 : vector<64x128xf32>
    %c0_11 = arith.constant 0 : index
    %c0_12 = arith.constant 0 : index
    %17 = vector.load %arg4[%c0_11, %c0_12] : memref<64x128xf32, #tpu.memory_space<vmem>>, vector<64x128xf32>
    %c0_13 = arith.constant 0 : index
    %c0_14 = arith.constant 0 : index
    %18 = vector.load %arg5[%c0_13, %c0_14] : memref<64x128xf32, #tpu.memory_space<vmem>>, vector<64x128xf32>
    %19 = arith.mulf %13, %17 : vector<64x128xf32>
    %20 = arith.mulf %16, %18 : vector<64x128xf32>
    %21 = arith.subf %19, %20 : vector<64x128xf32>
    %22 = arith.mulf %13, %18 : vector<64x128xf32>
    %23 = arith.mulf %16, %17 : vector<64x128xf32>
    %24 = arith.addf %22, %23 : vector<64x128xf32>
    %25 = tpu.concatenate %21, %24 in 1 : vector<64x128xf32>, vector<64x128xf32> -> vector<64x256xf32>
    %26 = arith.truncf %25 : vector<64x256xf32> to vector<64x256xbf16>
    %c0_15 = arith.constant 0 : index
    %c0_16 = arith.constant 0 : index
    %27 = vector.load %arg7[%c0_15, %c0_16] : memref<64x64xbf16, #tpu.memory_space<vmem>>, vector<64x64xbf16>
    %cst_17 = arith.constant dense<0.000000e+00> : vector<64x256xf32>
    %28 = tpu.matmul %27, %26, %cst_17 {dimension_numbers = #tpu.dot_dimension_numbers<[1], [0], [0], [1], [0, 0, 1, 1], [], []>} : vector<64x64xbf16>, vector<64x256xbf16>, vector<64x256xf32> -> vector<64x256xf32>
    %c0_18 = arith.constant 0 : index
    %c0_19 = arith.constant 0 : index
    %29 = vector.load %arg8[%c0_18, %c0_19] : memref<64x64xbf16, #tpu.memory_space<vmem>>, vector<64x64xbf16>
    %cst_20 = arith.constant dense<0.000000e+00> : vector<64x256xf32>
    %30 = tpu.matmul %29, %26, %cst_20 {dimension_numbers = #tpu.dot_dimension_numbers<[1], [0], [0], [1], [0, 0, 1, 1], [], []>} : vector<64x64xbf16>, vector<64x256xbf16>, vector<64x256xf32> -> vector<64x256xf32>
    %31 = vector.extract_strided_slice %28 {offsets = [0, 0], sizes = [64, 128], strides = [1, 1]} : vector<64x256xf32> to vector<64x128xf32>
    %32 = vector.extract_strided_slice %30 {offsets = [0, 128], sizes = [64, 128], strides = [1, 1]} : vector<64x256xf32> to vector<64x128xf32>
    %33 = arith.addf %31, %32 : vector<64x128xf32>
    %34 = vector.extract_strided_slice %28 {offsets = [0, 128], sizes = [64, 128], strides = [1, 1]} : vector<64x256xf32> to vector<64x128xf32>
    %35 = vector.extract_strided_slice %30 {offsets = [0, 0], sizes = [64, 128], strides = [1, 1]} : vector<64x256xf32> to vector<64x128xf32>
    %36 = arith.subf %34, %35 : vector<64x128xf32>
    %37 = tpu.concatenate %33, %36 in 1 : vector<64x128xf32>, vector<64x128xf32> -> vector<64x256xf32>
    %38 = arith.truncf %37 : vector<64x256xf32> to vector<64x256xbf16>
    %c0_21 = arith.constant 0 : index
    %c0_22 = arith.constant 0 : index
    %39 = vector.load %arg9[%c0_21, %c0_22] : memref<256x16xbf16, #tpu.memory_space<vmem>>, vector<256x16xbf16>
    %cst_23 = arith.constant dense<0.000000e+00> : vector<64x16xf32>
    %40 = tpu.matmul %38, %39, %cst_23 {dimension_numbers = #tpu.dot_dimension_numbers<[1], [0], [0], [1], [0, 0, 1, 1], [], []>} : vector<64x256xbf16>, vector<256x16xbf16>, vector<64x16xf32> -> vector<64x16xf32>
    %41 = arith.truncf %40 : vector<64x16xf32> to vector<64x16xbf16>
    %c0_24 = arith.constant 0 : index
    %c0_25 = arith.constant 0 : index
    %42 = vector.load %arg10[%c0_24, %c0_25] : memref<64x16xbf16, #tpu.memory_space<vmem>>, vector<64x16xbf16>
    tpu.vector_store %arg10[%c0_24, %c0_25], %41 {strides = array<i32>} : memref<64x16xbf16, #tpu.memory_space<vmem>>, vector<64x16xbf16>,
    return
  }
  func.func @transform_0(%arg0: i32, %arg1: i32) -> (i32, i32) {
    %c1_i32 = arith.constant 1 : i32
    %0 = arith.muli %arg1, %c1_i32 : i32
    %1 = arith.addi %0, %arg0 : i32
    %c0_i32 = arith.constant 0 : i32
    %c0_i32_0 = arith.constant 0 : i32
    return %1, %c0_i32 : i32, i32
  }
  func.func @transform_1(%arg0: i32, %arg1: i32) -> (i32, i32) {
    %c0_i32 = arith.constant 0 : i32
    %c0_i32_0 = arith.constant 0 : i32
    return %arg0, %c0_i32 : i32, i32
  }
  func.func @transform_2(%arg0: i32, %arg1: i32) -> (i32, i32) {
    %c0_i32 = arith.constant 0 : i32
    %c0_i32_0 = arith.constant 0 : i32
    return %arg0, %c0_i32 : i32, i32
  }
  func.func @transform_3(%arg0: i32, %arg1: i32) -> (i32, i32) {
    %c0_i32 = arith.constant 0 : i32
    %c0_i32_0 = arith.constant 0 : i32
    return %arg0, %c0_i32 : i32, i32
  }
  func.func @transform_4(%arg0: i32, %arg1: i32) -> (i32, i32) {
    %c0_i32 = arith.constant 0 : i32
    %c0_i32_0 = arith.constant 0 : i32
    %c0_i32_1 = arith.constant 0 : i32
    return %c0_i32, %c0_i32_0 : i32, i32
  }
  func.func @transform_5(%arg0: i32, %arg1: i32) -> (i32, i32) {
    %c0_i32 = arith.constant 0 : i32
    %c0_i32_0 = arith.constant 0 : i32
    %c0_i32_1 = arith.constant 0 : i32
    return %c0_i32, %c0_i32_0 : i32, i32
  }
  func.func @transform_6(%arg0: i32, %arg1: i32) -> (i32, i32) {
    %c0_i32 = arith.constant 0 : i32
    %c0_i32_0 = arith.constant 0 : i32
    %c0_i32_1 = arith.constant 0 : i32
    return %c0_i32, %c0_i32_0 : i32, i32
  }
  func.func @transform_7(%arg0: i32, %arg1: i32) -> (i32, i32) {
    %c0_i32 = arith.constant 0 : i32
    %c0_i32_0 = arith.constant 0 : i32
    %c0_i32_1 = arith.constant 0 : i32
    return %c0_i32, %c0_i32_0 : i32, i32
  }
  func.func @transform_8(%arg0: i32, %arg1: i32) -> (i32, i32) {
    %c1_i32 = arith.constant 1 : i32
    %0 = arith.muli %arg1, %c1_i32 : i32
    %1 = arith.addi %0, %arg0 : i32
    %c0_i32 = arith.constant 0 : i32
    %c0_i32_0 = arith.constant 0 : i32
    return %1, %c0_i32 : i32, i32
  }
}

module attributes {stable_mosaic.version = 11 : i64} {
  func.func @_conv_stats_kernel(%arg0: i32, %arg1: memref<32x64xbf16, #tpu.memory_space<vmem>>, %arg2: memref<64x128xbf16, #tpu.memory_space<vmem>>, %arg3: memref<32x128xbf16, #tpu.memory_space<vmem>>, %arg4: memref<1x2x128xf32, #tpu.memory_space<vmem>>) attributes {dimension_semantics = [#tpu.dimension_semantics<parallel>], iteration_bounds = array<i64: 1>, scalar_prefetch = 0 : i64, scratch_operands = 0 : i64, tpu.core_type = #tpu.core_type<tc>, window_params = [{transform_indices = @transform_0, window_bounds = array<i64: 32, 64>}, {pipeline_mode = #tpu.pipeline_mode<synchronous>, transform_indices = @transform_1, window_bounds = array<i64: 64, 128>}, {transform_indices = @transform_2, window_bounds = array<i64: 32, 128>}, {transform_indices = @transform_3, window_bounds = array<i64: 1, 2, 128>}]} {
    %c0 = arith.constant 0 : index
    %c0_0 = arith.constant 0 : index
    %0 = vector.load %arg1[%c0, %c0_0] : memref<32x64xbf16, #tpu.memory_space<vmem>>, vector<32x64xbf16>
    %c0_1 = arith.constant 0 : index
    %c0_2 = arith.constant 0 : index
    %1 = vector.load %arg2[%c0_1, %c0_2] : memref<64x128xbf16, #tpu.memory_space<vmem>>, vector<64x128xbf16>
    %cst = arith.constant dense<0.000000e+00> : vector<32x128xf32>
    %2 = tpu.matmul %0, %1, %cst {dimension_numbers = #tpu.dot_dimension_numbers<[1], [0], [0], [1], [0, 0, 1, 1], [], []>} : vector<32x64xbf16>, vector<64x128xbf16>, vector<32x128xf32> -> vector<32x128xf32>
    %3 = arith.truncf %2 : vector<32x128xf32> to vector<32x128xbf16>
    %c0_3 = arith.constant 0 : index
    %c0_4 = arith.constant 0 : index
    %4 = vector.load %arg3[%c0_3, %c0_4] : memref<32x128xbf16, #tpu.memory_space<vmem>>, vector<32x128xbf16>
    tpu.vector_store %arg3[%c0_3, %c0_4], %3 {strides = array<i32>} : memref<32x128xbf16, #tpu.memory_space<vmem>>, vector<32x128xbf16>,
    %cst_5 = arith.constant dense<0.000000e+00> : vector<128xf32>
    %5 = vector.multi_reduction <add>, %2, %cst_5 [0] : vector<32x128xf32> to vector<128xf32>
    %6 = vector.shape_cast %5 : vector<128xf32> to vector<1x128xf32>
    %7 = arith.mulf %2, %2 : vector<32x128xf32>
    %cst_6 = arith.constant dense<0.000000e+00> : vector<128xf32>
    %8 = vector.multi_reduction <add>, %7, %cst_6 [0] : vector<32x128xf32> to vector<128xf32>
    %9 = vector.shape_cast %8 : vector<128xf32> to vector<1x128xf32>
    %10 = tpu.concatenate %6, %9 in 0 : vector<1x128xf32>, vector<1x128xf32> -> vector<2x128xf32>
    %11 = vector.shape_cast %10 : vector<2x128xf32> to vector<1x2x128xf32>
    %c0_7 = arith.constant 0 : index
    %c0_8 = arith.constant 0 : index
    %c0_9 = arith.constant 0 : index
    %12 = vector.load %arg4[%c0_7, %c0_8, %c0_9] : memref<1x2x128xf32, #tpu.memory_space<vmem>>, vector<1x2x128xf32>
    tpu.vector_store %arg4[%c0_7, %c0_8, %c0_9], %11 {strides = array<i32>} : memref<1x2x128xf32, #tpu.memory_space<vmem>>, vector<1x2x128xf32>,
    return
  }
  func.func @transform_0(%arg0: i32) -> (i32, i32) {
    %c0_i32 = arith.constant 0 : i32
    %c0_i32_0 = arith.constant 0 : i32
    return %arg0, %c0_i32 : i32, i32
  }
  func.func @transform_1(%arg0: i32) -> (i32, i32) {
    %c0_i32 = arith.constant 0 : i32
    %c0_i32_0 = arith.constant 0 : i32
    %c0_i32_1 = arith.constant 0 : i32
    return %c0_i32, %c0_i32_0 : i32, i32
  }
  func.func @transform_2(%arg0: i32) -> (i32, i32) {
    %c0_i32 = arith.constant 0 : i32
    %c0_i32_0 = arith.constant 0 : i32
    return %arg0, %c0_i32 : i32, i32
  }
  func.func @transform_3(%arg0: i32) -> (i32, i32, i32) {
    %c0_i32 = arith.constant 0 : i32
    %c0_i32_0 = arith.constant 0 : i32
    %c0_i32_1 = arith.constant 0 : i32
    return %arg0, %c0_i32, %c0_i32_0 : i32, i32, i32
  }
}

module attributes {stable_mosaic.version = 11 : i64} {
  func.func @_bn_apply_kernel(%arg0: i32, %arg1: memref<32x128xbf16, #tpu.memory_space<vmem>>, %arg2: memref<1x128xf32, #tpu.memory_space<vmem>>, %arg3: memref<1x128xf32, #tpu.memory_space<vmem>>, %arg4: memref<32x128xf32, #tpu.memory_space<vmem>>) attributes {dimension_semantics = [#tpu.dimension_semantics<parallel>], iteration_bounds = array<i64: 1>, scalar_prefetch = 0 : i64, scratch_operands = 0 : i64, tpu.core_type = #tpu.core_type<tc>, window_params = [{transform_indices = @transform_0, window_bounds = array<i64: 32, 128>}, {pipeline_mode = #tpu.pipeline_mode<synchronous>, transform_indices = @transform_1, window_bounds = array<i64: 1, 128>}, {pipeline_mode = #tpu.pipeline_mode<synchronous>, transform_indices = @transform_2, window_bounds = array<i64: 1, 128>}, {transform_indices = @transform_3, window_bounds = array<i64: 32, 128>}]} {
    %c0 = arith.constant 0 : index
    %c0_0 = arith.constant 0 : index
    %0 = vector.load %arg1[%c0, %c0_0] : memref<32x128xbf16, #tpu.memory_space<vmem>>, vector<32x128xbf16>
    %1 = arith.extf %0 : vector<32x128xbf16> to vector<32x128xf32>
    %c0_1 = arith.constant 0 : index
    %c0_2 = arith.constant 0 : index
    %2 = vector.load %arg2[%c0_1, %c0_2] : memref<1x128xf32, #tpu.memory_space<vmem>>, vector<1x128xf32>
    %3 = vector.broadcast %2 : vector<1x128xf32> to vector<32x128xf32>
    %4 = arith.mulf %1, %3 : vector<32x128xf32>
    %c0_3 = arith.constant 0 : index
    %c0_4 = arith.constant 0 : index
    %5 = vector.load %arg3[%c0_3, %c0_4] : memref<1x128xf32, #tpu.memory_space<vmem>>, vector<1x128xf32>
    %6 = vector.broadcast %5 : vector<1x128xf32> to vector<32x128xf32>
    %7 = arith.addf %4, %6 : vector<32x128xf32>
    %c0_5 = arith.constant 0 : index
    %c0_6 = arith.constant 0 : index
    %8 = vector.load %arg4[%c0_5, %c0_6] : memref<32x128xf32, #tpu.memory_space<vmem>>, vector<32x128xf32>
    tpu.vector_store %arg4[%c0_5, %c0_6], %7 {strides = array<i32>} : memref<32x128xf32, #tpu.memory_space<vmem>>, vector<32x128xf32>,
    return
  }
  func.func @transform_0(%arg0: i32) -> (i32, i32) {
    %c0_i32 = arith.constant 0 : i32
    %c0_i32_0 = arith.constant 0 : i32
    return %arg0, %c0_i32 : i32, i32
  }
  func.func @transform_1(%arg0: i32) -> (i32, i32) {
    %c0_i32 = arith.constant 0 : i32
    %c0_i32_0 = arith.constant 0 : i32
    %c0_i32_1 = arith.constant 0 : i32
    return %c0_i32, %c0_i32_0 : i32, i32
  }
  func.func @transform_2(%arg0: i32) -> (i32, i32) {
    %c0_i32 = arith.constant 0 : i32
    %c0_i32_0 = arith.constant 0 : i32
    %c0_i32_1 = arith.constant 0 : i32
    return %c0_i32, %c0_i32_0 : i32, i32
  }
  func.func @transform_3(%arg0: i32) -> (i32, i32) {
    %c0_i32 = arith.constant 0 : i32
    %c0_i32_0 = arith.constant 0 : i32
    return %arg0, %c0_i32 : i32, i32
  }
}

</mosaic_0001>

<llo_original>
// kernel: fwd.3
$region0: #{fwd.3}
  #allocation0 [shape = 'u32[]', space=smem, size = 0x4, offset = 0x4, fixed_abs, tag = 'smem constant byte address 0x4 - core index']
  #allocation1 [shape = 'u32[144,128]{1,0:T(1,128)}', space=vmem, size = 0x12000, scoped, tag = 'internal scratch']
  %s0 = inlined_call_operand.vmem [shape: f32[128,16], index: 0, kind: input, shape index: {}]
  %s1 = inlined_call_operand.vmem [shape: f32[64,16], index: 1, kind: input, shape index: {}]
  %s2 = inlined_call_operand.vmem [shape: f32[64,128], index: 2, kind: input, shape index: {}]
  %s3 = inlined_call_operand.hbm [shape: f32[64,128], index: 3, kind: input, shape index: {}]
  %s4 = inlined_call_operand.hbm [shape: bf16[16,256], index: 4, kind: input, shape index: {}]
  %s5 = inlined_call_operand.vmem [shape: bf16[64,64], index: 5, kind: input, shape index: {}]
  %s6 = inlined_call_operand.hbm [shape: bf16[64,64], index: 6, kind: input, shape index: {}]
  %s7 = inlined_call_operand.vmem [shape: bf16[256,16], index: 7, kind: input, shape index: {}]
  %s8 = inlined_call_operand.vmem [shape: bf16[128,16], index: 8, kind: output, shape index: {}]
  %s9 = sld [smem:[#allocation0]]
  $region77: #{fwd.3} parent=0
    _
  %s11 = ssub.s32 1, %s9
  %s12 = scalar_select 0, %s11, %s9
  $region1: #{fwd.3} parent=0
    #allocation2 [shape = 'u8[32768]{0}', space=vmem, size = 0x8000, scoped, tag = 'input window, operand 3, single buffered']
    #allocation3 [shape = 's32[2]{0}', space=sflag, size = 0x8, scoped, tag = 'scoped memory for fwd.3']
    #allocation4 [shape = 'u8[8192]{0}', space=vmem, size = 0x2000, scoped, tag = 'input window, operand 4, single buffered']
    #allocation5 [shape = 's32[1]{0}', space=sflag, size = 0x4, scoped, tag = 'scoped memory for fwd.3']
    #allocation6 [shape = 'u8[16384]{0}', space=vmem, size = 0x4000, scoped, tag = 'input window, operand 6, single buffered']
    %13 = vsyncpa [#allocation3], 0
    %14 = vsyncpa [#allocation5], 0
    loop: start=0, step=1, limit=4
    $region2: #{fwd.3} parent=1 // loop_pre_header
      _
    $region3: #{fwd.3} parent=1 // loop_header
      %s16 = sphi 0, %s20
      %p17 = scmp.ge.s32.totalorder %s16, 4
      %s23 = sphi 0, %s35
      %s24 = sphi 0, %s31
      %s25 = sphi 0, %s23
      %s26 = sphi 0, %s24
      %s27 = sphi 0, %s25
      %s28 = sphi 0, %s26
      %s40 = sphi 0, %s42
      %s43 = sphi 0, %s40
      %s44 = sphi 0, %s43
      %s60 = sphi 0, %s44
      %s66 = sphi 0, %s68
      %s69 = sphi 0, %s66
      %s70 = sphi 0, %s69
      %s86 = sphi 0, %s70
      %s92 = sphi 0, %s94
      %s95 = sphi 0, %s92
      %s96 = sphi 0, %s95
      %s112 = sphi 0, %s96
      %s118 = sphi 0, %s120
      %s121 = sphi 0, %s118
      %s122 = sphi 0, %s121
      %s138 = sphi 0, %s122
      %s142 = sphi 0, %s142
      %s144 = sphi 0, %s142
      %s145 = sphi 0, %s144
      %s159 = sphi 0, %s145
      %s163 = sphi 0, %s163
      %s165 = sphi 0, %s163
      %s166 = sphi 0, %s165
      %s180 = sphi 0, %s166
      %s184 = sphi 0, %s184
      %s186 = sphi 0, %s184
      %s187 = sphi 0, %s186
      %s201 = sphi 0, %s187
      %s205 = sphi 0, %s205
      %s207 = sphi 0, %s205
      %s208 = sphi 0, %s207
      %s222 = sphi 0, %s208
      %s230 = sphi 0, %s232
      %s233 = sphi 0, %s230
      %s234 = sphi 0, %s233
      %s250 = sphi 0, %s234
    $region4: #{fwd.3} parent=1 // loop_header_branch
      %19 = sbr.rel (%p17) target = $region8
    $region5: #{fwd.3} parent=1 // loop_body
      %s21 = ssub.s32 %s16, 1
      %s22 = ssub.s32 %s16, 2
      %s29 = sadd.s32 1, %s24
      %p30 = scmp.ge.s32.totalorder %s29, 2
      %s31 = scalar_select %p30, 0, %s29
      %s32 = sadd.s32 1, %s23
      %s33 = scalar_select %p30, %s32, %s23
      %p34 = scmp.ge.s32.totalorder %s33, 1
      %s35 = scalar_select %p34, 0, %s33
      %s36 = sadd.s32 %s24, %s23
      %s37 = sadd.s32 %s31, %s35
      %s38 = ssub.s32 %s36, %s37
      %p39 = scmp.eq.s32.totalorder %s38, 0
      %s41 = sadd.s32 %s40, 1
      %s42 = scalar_select %p39, %s40, %s41
      %p45 = pneg %p39
      %p46 = scmp.eq.s32.totalorder %s16, 1
      %p47 = por %p45, %p46
      %p48 = scmp.ne.s32.totalorder %s40, %s43
      %p49 = scmp.eq.s32.totalorder %s16, 0
      %p50 = por %p48, %p49
      %p51 = scmp.ne.s32.totalorder %s40, %s43
      %p52 = scmp.eq.s32.totalorder %s21, 1
      %p53 = por %p51, %p52
      %p54 = scmp.ne.s32.totalorder %s43, %s44
      %p55 = scmp.eq.s32.totalorder %s21, 0
      %p56 = por %p54, %p55
      %p57 = scmp.ne.s32.totalorder %s43, %s44
      %p58 = scmp.eq.s32.totalorder %s22, 1
      %p59 = por %p57, %p58
      %p61 = scmp.ne.s32.totalorder %s44, %s60
      %p62 = scmp.eq.s32.totalorder %s22, 0
      %p63 = por %p61, %p62
      %s64 = ssub.s32 %s23, %s35
      %p65 = scmp.eq.s32.totalorder %s64, 0
      %s67 = sadd.s32 %s66, 1
      %s68 = scalar_select %p65, %s66, %s67
      %p71 = pneg %p65
      %p72 = scmp.eq.s32.totalorder %s16, 1
      %p73 = por %p71, %p72
      %p74 = scmp.ne.s32.totalorder %s66, %s69
      %p75 = scmp.eq.s32.totalorder %s16, 0
      %p76 = por %p74, %p75
      %p77 = scmp.ne.s32.totalorder %s66, %s69
      %p78 = scmp.eq.s32.totalorder %s21, 1
      %p79 = por %p77, %p78
      %p80 = scmp.ne.s32.totalorder %s69, %s70
      %p81 = scmp.eq.s32.totalorder %s21, 0
      %p82 = por %p80, %p81
      %p83 = scmp.ne.s32.totalorder %s69, %s70
      %p84 = scmp.eq.s32.totalorder %s22, 1
      %p85 = por %p83, %p84
      %p87 = scmp.ne.s32.totalorder %s70, %s86
      %p88 = scmp.eq.s32.totalorder %s22, 0
      %p89 = por %p87, %p88
      %s90 = ssub.s32 %s23, %s35
      %p91 = scmp.eq.s32.totalorder %s90, 0
      %s93 = sadd.s32 %s92, 1
      %s94 = scalar_select %p91, %s92, %s93
      %p97 = pneg %p91
      %p98 = scmp.eq.s32.totalorder %s16, 1
      %p99 = por %p97, %p98
      %p100 = scmp.ne.s32.totalorder %s92, %s95
      %p101 = scmp.eq.s32.totalorder %s16, 0
      %p102 = por %p100, %p101
      %p103 = scmp.ne.s32.totalorder %s92, %s95
      %p104 = scmp.eq.s32.totalorder %s21, 1
      %p105 = por %p103, %p104
      %p106 = scmp.ne.s32.totalorder %s95, %s96
      %p107 = scmp.eq.s32.totalorder %s21, 0
      %p108 = por %p106, %p107
      %p109 = scmp.ne.s32.totalorder %s95, %s96
      %p110 = scmp.eq.s32.totalorder %s22, 1
      %p111 = por %p109, %p110
      %p113 = scmp.ne.s32.totalorder %s96, %s112
      %p114 = scmp.eq.s32.totalorder %s22, 0
      %p115 = por %p113, %p114
      %s116 = ssub.s32 %s23, %s35
      %p117 = scmp.eq.s32.totalorder %s116, 0
      %s119 = sadd.s32 %s118, 1
      %s120 = scalar_select %p117, %s118, %s119
      %p123 = pneg %p117
      %p124 = scmp.eq.s32.totalorder %s16, 1
      %p125 = por %p123, %p124
      %p126 = scmp.ne.s32.totalorder %s118, %s121
      %p127 = scmp.eq.s32.totalorder %s16, 0
      %p128 = por %p126, %p127
      %p129 = scmp.ne.s32.totalorder %s118, %s121
      %p130 = scmp.eq.s32.totalorder %s21, 1
      %p131 = por %p129, %p130
      %p132 = scmp.ne.s32.totalorder %s121, %s122
      %p133 = scmp.eq.s32.totalorder %s21, 0
      %p134 = por %p132, %p133
      %p135 = scmp.ne.s32.totalorder %s121, %s122
      %p136 = scmp.eq.s32.totalorder %s22, 1
      %p137 = por %p135, %p136
      %p139 = scmp.ne.s32.totalorder %s122, %s138
      %p140 = scmp.eq.s32.totalorder %s22, 0
      %p141 = por %p139, %p140
      %s143 = sadd.s32 %s142, 1
      %p146 = scmp.eq.s32.totalorder %s16, 1
      %p147 = scmp.ne.s32.totalorder %s142, %s144
      %p148 = scmp.eq.s32.totalorder %s16, 0
      %p149 = por %p147, %p148
      %p150 = scmp.ne.s32.totalorder %s142, %s144
      %p151 = scmp.eq.s32.totalorder %s21, 1
      %p152 = por %p150, %p151
      %p153 = scmp.ne.s32.totalorder %s144, %s145
      %p154 = scmp.eq.s32.totalorder %s21, 0
      %p155 = por %p153, %p154
      %p156 = scmp.ne.s32.totalorder %s144, %s145
      %p157 = scmp.eq.s32.totalorder %s22, 1
      %p158 = por %p156, %p157
      %p160 = scmp.ne.s32.totalorder %s145, %s159
      %p161 = scmp.eq.s32.totalorder %s22, 0
      %p162 = por %p160, %p161
      %s164 = sadd.s32 %s163, 1
      %p167 = scmp.eq.s32.totalorder %s16, 1
      %p168 = scmp.ne.s32.totalorder %s163, %s165
      %p169 = scmp.eq.s32.totalorder %s16, 0
      %p170 = por %p168, %p169
      %p171 = scmp.ne.s32.totalorder %s163, %s165
      %p172 = scmp.eq.s32.totalorder %s21, 1
      %p173 = por %p171, %p172
      %p174 = scmp.ne.s32.totalorder %s165, %s166
      %p175 = scmp.eq.s32.totalorder %s21, 0
      %p176 = por %p174, %p175
      %p177 = scmp.ne.s32.totalorder %s165, %s166
      %p178 = scmp.eq.s32.totalorder %s22, 1
      %p179 = por %p177, %p178
      %p181 = scmp.ne.s32.totalorder %s166, %s180
      %p182 = scmp.eq.s32.totalorder %s22, 0
      %p183 = por %p181, %p182
      %s185 = sadd.s32 %s184, 1
      %p188 = scmp.eq.s32.totalorder %s16, 1
      %p189 = scmp.ne.s32.totalorder %s184, %s186
      %p190 = scmp.eq.s32.totalorder %s16, 0
      %p191 = por %p189, %p190
      %p192 = scmp.ne.s32.totalorder %s184, %s186
      %p193 = scmp.eq.s32.totalorder %s21, 1
      %p194 = por %p192, %p193
      %p195 = scmp.ne.s32.totalorder %s186, %s187
      %p196 = scmp.eq.s32.totalorder %s21, 0
      %p197 = por %p195, %p196
      %p198 = scmp.ne.s32.totalorder %s186, %s187
      %p199 = scmp.eq.s32.totalorder %s22, 1
      %p200 = por %p198, %p199
      %p202 = scmp.ne.s32.totalorder %s187, %s201
      %p203 = scmp.eq.s32.totalorder %s22, 0
      %p204 = por %p202, %p203
      %s206 = sadd.s32 %s205, 1
      %p209 = scmp.eq.s32.totalorder %s16, 1
      %p210 = scmp.ne.s32.totalorder %s205, %s207
      %p211 = scmp.eq.s32.totalorder %s16, 0
      %p212 = por %p210, %p211
      %p213 = scmp.ne.s32.totalorder %s205, %s207
      %p214 = scmp.eq.s32.totalorder %s21, 1
      %p215 = por %p213, %p214
      %p216 = scmp.ne.s32.totalorder %s207, %s208
      %p217 = scmp.eq.s32.totalorder %s21, 0
      %p218 = por %p216, %p217
      %p219 = scmp.ne.s32.totalorder %s207, %s208
      %p220 = scmp.eq.s32.totalorder %s22, 1
      %p221 = por %p219, %p220
      %p223 = scmp.ne.s32.totalorder %s208, %s222
      %p224 = scmp.eq.s32.totalorder %s22, 0
      %p225 = por %p223, %p224
      %s226 = sadd.s32 %s24, %s23
      %s227 = sadd.s32 %s31, %s35
      %s228 = ssub.s32 %s226, %s227
      %p229 = scmp.eq.s32.totalorder %s228, 0
      %s231 = sadd.s32 %s230, 1
      %s232 = scalar_select %p229, %s230, %s231
      %p235 = pneg %p229
      %p236 = scmp.eq.s32.totalorder %s16, 1
      %p237 = por %p235, %p236
      %p238 = scmp.ne.s32.totalorder %s230, %s233
      %p239 = scmp.eq.s32.totalorder %s16, 0
      %p240 = por %p238, %p239
      %p241 = scmp.ne.s32.totalorder %s230, %s233
      %p242 = scmp.eq.s32.totalorder %s21, 1
      %p243 = por %p241, %p242
      %p244 = scmp.ne.s32.totalorder %s233, %s234
      %p245 = scmp.eq.s32.totalorder %s21, 0
      %p246 = por %p244, %p245
      %p247 = scmp.ne.s32.totalorder %s233, %s234
      %p248 = scmp.eq.s32.totalorder %s22, 1
      %p249 = por %p247, %p248
      %p251 = scmp.ne.s32.totalorder %s234, %s250
      %p252 = scmp.eq.s32.totalorder %s22, 0
      %p253 = por %p251, %p252
      %p254 = scmp.le.s32.totalorder 1, %s16
      %p255 = scmp.lt.s32.totalorder %s16, 3
      %p256 = pnand %p254, %p255
      %p257 = pneg %p256
      // Predicated region
      $region9: #{fwd.3} parent=5 // pred_check
        _
      $region10: #{fwd.3} parent=5 // pred_check_branch
        %259 = sbr.rel (%p256) target = $region12
      $region11: #{fwd.3} parent=5 // pred_region
        %s260 = ssub.s32 %s16, 1
        // Predicated region
        $region13: #{fwd.3} parent=11 // pred_check
          %p261 = pneg %p82
        $region14: #{fwd.3} parent=11 // pred_check_branch
          %263 = sbr.rel (%p261) target = $region16
        $region15: #{fwd.3} parent=11 // pred_region
          %s264 = smul.u32 8, %s25
          %p265 = scmp.lt.s32.totalorder %s264, 7
          %s266 = scalar_select %p265, %s264, 7
          %s267 = smul.addr %s266, 8
          %s268 = scalar_lea.vmem %s1, %s267
          %s269 = smul.u32 8, %s25
        $region16: #{fwd.3} parent=11 // pred_fallthru
          _
        // Predicated region
        $region17: #{fwd.3} parent=11 // pred_check
          %p270 = pneg %p108
        $region18: #{fwd.3} parent=11 // pred_check_branch
          %272 = sbr.rel (%p270) target = $region20
        $region19: #{fwd.3} parent=11 // pred_region
          %s273 = smul.u32 8, %s25
          %p274 = scmp.lt.s32.totalorder %s273, 7
          %s275 = scalar_select %p274, %s273, 7
          %s276 = smul.addr %s275, 8
          %s277 = scalar_lea.vmem %s2, %s276
          %s278 = smul.u32 8, %s25
        $region20: #{fwd.3} parent=11 // pred_fallthru
          _
        // Predicated region
        $region21: #{fwd.3} parent=11 // pred_check
          %p279 = pneg %p134
        $region22: #{fwd.3} parent=11 // pred_check_branch
          %281 = sbr.rel (%p279) target = $region24
        $region23: #{fwd.3} parent=11 // pred_region
          %s282 = smul.u32 8, %s25
          %s284 = ssub.s32 1024, 1024
          %285 = vsyncadd [#allocation3], %s284
          %s286 = smul.addr %s282, 128
          %s287 = scalar_lea.hbm %s3, %s286
          %s288 = sshll.u32 [#allocation2], 4
          %s289 = int_to_ptr.vmem [resolvable:$true] %s288
          %294 = dma.hbm_to_vmem [thread:$0]  %s287, 1024, %s289, [#allocation3], 128, 128, 8
        $region24: #{fwd.3} parent=11 // pred_fallthru
          _
        // Predicated region
        $region25: #{fwd.3} parent=11 // pred_check
          %p295 = pneg %p155
        $region26: #{fwd.3} parent=11 // pred_check_branch
          %297 = sbr.rel (%p295) target = $region28
        $region27: #{fwd.3} parent=11 // pred_region
          %s299 = ssub.s32 256, 256
          %300 = vsyncadd [#allocation5], %s299
          %s301 = sshll.u32 [#allocation4], 4
          %s302 = int_to_ptr.vmem [resolvable:$true] %s301
          %307 = dma.hbm_to_vmem [thread:$0]  %s4, 256, %s302, [#allocation5], 128, 128, 8
        $region28: #{fwd.3} parent=11 // pred_fallthru
          _
        // Predicated region
        $region29: #{fwd.3} parent=11 // pred_check
          %p308 = pneg %p176
        $region30: #{fwd.3} parent=11 // pred_check_branch
          %310 = sbr.rel (%p308) target = $region32
        $region31: #{fwd.3} parent=11 // pred_region
          _
        $region32: #{fwd.3} parent=11 // pred_fallthru
          _
        // Predicated region
        $region33: #{fwd.3} parent=11 // pred_check
          %p311 = pneg %p197
        $region34: #{fwd.3} parent=11 // pred_check_branch
          %313 = sbr.rel (%p311) target = $region36
        $region35: #{fwd.3} parent=11 // pred_region
          %s315 = ssub.s32 512, 512
          %316 = vsyncadd [#allocation5], %s315
          %s317 = sshll.u32 [#allocation6], 4
          %s318 = int_to_ptr.vmem [resolvable:$true] %s317
          %323 = dma.hbm_to_vmem [thread:$0]  %s6, 512, %s318, [#allocation5], 64, 64, 4
        $region36: #{fwd.3} parent=11 // pred_fallthru
          _
        // Predicated region
        $region37: #{fwd.3} parent=11 // pred_check
          %p324 = pneg %p218
        $region38: #{fwd.3} parent=11 // pred_check_branch
          %326 = sbr.rel (%p324) target = $region40
        $region39: #{fwd.3} parent=11 // pred_region
          _
        $region40: #{fwd.3} parent=11 // pred_fallthru
          _
      $region12: #{fwd.3} parent=5 // pred_fallthru
        _
      %p327 = scmp.lt.s32.totalorder %s16, 2
      // Predicated region
      $region41: #{fwd.3} parent=5 // pred_check
        %p328 = pneg %p327
      $region42: #{fwd.3} parent=5 // pred_check_branch
        %330 = sbr.rel (%p328) target = $region44
      $region43: #{fwd.3} parent=5 // pred_region
        // Predicated region
        $region45: #{fwd.3} parent=43 // pred_check
          %p331 = pneg %p50
        $region46: #{fwd.3} parent=43 // pred_check_branch
          %333 = sbr.rel (%p331) target = $region48
        $region47: #{fwd.3} parent=43 // pred_region
          %s334 = sadd.s32 %s24, %s23
          %s335 = smul.u32 8, %s334
          %p336 = scmp.lt.s32.totalorder %s335, 15
          %s337 = scalar_select %p336, %s335, 15
          %s338 = smul.addr %s337, 8
          %s339 = scalar_lea.vmem %s0, %s338
          %s340 = sadd.s32 %s24, %s23
          %s341 = smul.u32 8, %s340
        $region48: #{fwd.3} parent=43 // pred_fallthru
          _
      $region44: #{fwd.3} parent=5 // pred_fallthru
        _
      %p342 = scmp.le.s32.totalorder 1, %s16
      %p343 = scmp.lt.s32.totalorder %s16, 3
      %p344 = pnand %p342, %p343
      %p345 = pneg %p344
      // Predicated region
      $region49: #{fwd.3} parent=5 // pred_check
        _
      $region50: #{fwd.3} parent=5 // pred_check_branch
        %347 = sbr.rel (%p344) target = $region52
      $region51: #{fwd.3} parent=5 // pred_region
        %s348 = ssub.s32 %s16, 1
        // Predicated region
        $region53: #{fwd.3} parent=51 // pred_check
          %p349 = pneg %p134
        $region54: #{fwd.3} parent=51 // pred_check_branch
          %351 = sbr.rel (%p349) target = $region56
        $region55: #{fwd.3} parent=51 // pred_region
          %352 = dma.done [#allocation3], 1024
        $region56: #{fwd.3} parent=51 // pred_fallthru
          _
        // Predicated region
        $region57: #{fwd.3} parent=51 // pred_check
          %p353 = pneg %p155
        $region58: #{fwd.3} parent=51 // pred_check_branch
          %355 = sbr.rel (%p353) target = $region60
        $region59: #{fwd.3} parent=51 // pred_region
          %356 = dma.done [#allocation5], 256
        $region60: #{fwd.3} parent=51 // pred_fallthru
          _
        // Predicated region
        $region61: #{fwd.3} parent=51 // pred_check
          %p357 = pneg %p197
        $region62: #{fwd.3} parent=51 // pred_check_branch
          %359 = sbr.rel (%p357) target = $region64
        $region63: #{fwd.3} parent=51 // pred_region
          %360 = dma.done [#allocation5], 512
        $region64: #{fwd.3} parent=51 // pred_fallthru
          _
        %s361 = sadd.s32 %s26, %s25
        %s362 = smul.u32 8, %s361
        %p363 = scmp.lt.s32.totalorder %s362, 15
        %s364 = scalar_select %p363, %s362, 15
        %s365 = smul.addr %s364, 8
        %s366 = scalar_lea.vmem %s0, %s365
        %p367 = pneg %p56
        %p368 = pneg %p53
        %s369 = smul.u32 8, %s25
        %p370 = scmp.lt.s32.totalorder %s369, 7
        %s371 = scalar_select %p370, %s369, 7
        %s372 = smul.addr %s371, 8
        %s373 = scalar_lea.vmem %s1, %s372
        %p374 = pneg %p82
        %p375 = pneg %p79
        %s376 = smul.u32 8, %s25
        %p377 = scmp.lt.s32.totalorder %s376, 7
        %s378 = scalar_select %p377, %s376, 7
        %s379 = smul.addr %s378, 8
        %s380 = scalar_lea.vmem %s2, %s379
        %p381 = pneg %p108
        %p382 = pneg %p105
        %p383 = pneg %p134
        %p384 = pneg %p131
        %p385 = pneg %p155
        %p386 = pneg %p152
        %p387 = pneg %p176
        %p388 = pneg %p173
        %p389 = pneg %p197
        %p390 = pneg %p194
        %p391 = pneg %p218
        %p392 = pneg %p215
        %p393 = pneg %p246
        %p394 = pneg %p243
        %s395 = sadd.s32 %s26, %s25
        %s396 = smul.u32 8, %s395
        %p397 = scmp.lt.s32.totalorder %s396, 15
        %s398 = scalar_select %p397, %s396, 15
        %s399 = smul.addr %s398, 4
        %s400 = scalar_lea.vmem %s8, %s399
        %s401 = sadd.s32 %s26, %s25
        %s402 = smul.u32 8, %s401
        %p403 = scmp.lt.s32.totalorder %s402, 15
        %s404 = scalar_select %p403, %s402, 15
        %s405 = smul.addr %s404, 8
        %s406 = scalar_lea.vmem %s0, %s405
        %s407 = sadd.s32 %s26, %s25
        %s408 = smul.u32 8, %s407
        %s409 = smul.u32 8, %s25
        %p410 = scmp.lt.s32.totalorder %s409, 7
        %s411 = scalar_select %p410, %s409, 7
        %s412 = smul.addr %s411, 8
        %s413 = scalar_lea.vmem %s1, %s412
        %s414 = smul.u32 8, %s25
        %s415 = smul.u32 8, %s25
        %p416 = scmp.lt.s32.totalorder %s415, 7
        %s417 = scalar_select %p416, %s415, 7
        %s418 = smul.addr %s417, 8
        %s419 = scalar_lea.vmem %s2, %s418
        %s420 = smul.u32 8, %s25
        %s421 = smul.u32 8, %s25
        %s422 = sadd.s32 %s26, %s25
        %s423 = smul.u32 8, %s422
        %p424 = scmp.lt.s32.totalorder %s423, 15
        %s425 = scalar_select %p424, %s423, 15
        %s426 = smul.addr %s425, 4
        %s427 = scalar_lea.vmem %s8, %s426
        %s428 = sadd.s32 %s26, %s25
        %s429 = smul.u32 8, %s428
        %v431 = vld [vmem:[%s406] sm:$0xff]
        %v432 = vld [vmem:[%s406 + $0x8] sm:$0xff]
        %v433 = vld [vmem:[%s406 + $0x10] sm:$0xff]
        %v434 = vld [vmem:[%s406 + $0x18] sm:$0xff]
        %v435 = vld [vmem:[%s406 + $0x20] sm:$0xff]
        %v436 = vld [vmem:[%s406 + $0x28] sm:$0xff]
        %v437 = vld [vmem:[%s406 + $0x30] sm:$0xff]
        %v438 = vld [vmem:[%s406 + $0x38] sm:$0xff]
        %v439 = vld [vmem:[%s413] sm:$0xff]
        %v440 = vld [vmem:[%s413 + $0x8] sm:$0xff]
        %v441 = vld [vmem:[%s413 + $0x10] sm:$0xff]
        %v442 = vld [vmem:[%s413 + $0x18] sm:$0xff]
        %v443 = vld [vmem:[%s413 + $0x20] sm:$0xff]
        %v444 = vld [vmem:[%s413 + $0x28] sm:$0xff]
        %v445 = vld [vmem:[%s413 + $0x30] sm:$0xff]
        %v446 = vld [vmem:[%s413 + $0x38] sm:$0xff]
        %v447 = vadd.f32 %v431, %v439
        %v448 = vadd.f32 %v432, %v440
        %v449 = vadd.f32 %v433, %v441
        %v450 = vadd.f32 %v434, %v442
        %v451 = vadd.f32 %v435, %v443
        %v452 = vadd.f32 %v436, %v444
        %v453 = vadd.f32 %v437, %v445
        %v454 = vadd.f32 %v438, %v446
        %v455 = vpack.c.bf16 %v448, %v447
        %v456 = vpack.c.bf16 %v450, %v449
        %v457 = vpack.c.bf16 %v452, %v451
        %v458 = vpack.c.bf16 %v454, %v453
        %v459 = vld [vmem:[#allocation4] sm:$0xff]
        %v460 = vld [vmem:[#allocation4 + $0x8] sm:$0xff]
        %v463 = vunpack.c.l.b16 %v459
        %v464 = vunpack.c.h.b16 %v459
        %v465 = vunpack.c.l.b16 %v460
        %v466 = vunpack.c.h.b16 %v460
        %v467 = vpack.c.b16 %v465, %v463
        %v468 = vpack.c.b16 %v466, %v464
        %vm471 = vcmask 130048
        %v473 = vsel %vm471, %v455, 0
        %v476 = vsel %vm471, %v456, 0
        %v479 = vsel %vm471, %v457, 0
        %v482 = vsel %vm471, %v458, 0
        %484 = vmatprep.subr.bf16.mxu0 0
        %485 = vmatpush1.bf16.msra.mxu0 0
        %486 = vmatprep.subr.bf16.mxu0 0
        %487 = vmatpush1.bf16.msra.mxu0 0
        %488 = vmatprep.subr.bf16.mxu0 0
        %489 = vmatpush1.bf16.msra.mxu0 0
        %490 = vmatprep.subr.bf16.mxu0 0
        %491 = vmatpush1.bf16.msra.mxu0 0
        %492 = vmatprep.subr.bf16.mxu0 0
        %493 = vmatpush1.bf16.msra.mxu0 0
        %494 = vmatprep.subr.bf16.mxu0 0
        %495 = vmatpush1.bf16.msra.mxu0 0
        %496 = vmatprep.subr.bf16.mxu0 0
        %497 = vmatpush1.bf16.msra.mxu0 0
        %498 = vmatprep.subr.bf16.mxu0 %v468
        %499 = vmatpush1.bf16.msra.mxu0 %v467
        %500 = vmatprep.subr.bf16.mxu0 0
        %501 = vmatpush2.bf16.msra.mxu0 0
        %502 = vmatprep.subr.bf16.mxu0 0
        %503 = vmatpush2.bf16.msra.mxu0 0
        %504 = vmatprep.subr.bf16.mxu0 0
        %505 = vmatpush2.bf16.msra.mxu0 0
        %506 = vmatprep.subr.bf16.mxu0 0
        %507 = vmatpush2.bf16.msra.mxu0 0
        %508 = vmatprep.subr.bf16.mxu0 0
        %509 = vmatpush2.bf16.msra.mxu0 0
        %510 = vmatprep.subr.bf16.mxu0 0
        %511 = vmatpush2.bf16.msra.mxu0 0
        %512 = vmatprep.subr.bf16.mxu0 0
        %513 = vmatpush2.bf16.msra.mxu0 0
        %514 = vmatprep.subr.bf16.mxu0 0
        %515 = vmatpush2.bf16.msra.mxu0 0
        %516 = vmatprep.mubr.bf16.mxu0 0
        %517 = vmatmul.mubr.bf16.gmra.mxu0 %v473
        %v518 = vpop.f32.mrf.mxu0
        %v519 = vadd.f32 0.0, %v518
        %v520 = vpop.f32.mrf.mxu0
        %v521 = vadd.f32 0.0, %v520
        %v522 = vpop.f32.mrf.mxu0
        %v523 = vadd.f32 0.0, %v522
        %v524 = vpop.f32.mrf.mxu0
        %v525 = vadd.f32 0.0, %v524
        %526 = vmatprep.mubr.bf16.mxu0 0
        %527 = vmatmul.mubr.bf16.gmra.mxu0 %v476
        %v528 = vpop.f32.mrf.mxu0
        %v529 = vadd.f32 0.0, %v528
        %v530 = vpop.f32.mrf.mxu0
        %v531 = vadd.f32 0.0, %v530
        %v532 = vpop.f32.mrf.mxu0
        %v533 = vadd.f32 0.0, %v532
        %v534 = vpop.f32.mrf.mxu0
        %v535 = vadd.f32 0.0, %v534
        %536 = vmatprep.mubr.bf16.mxu0 0
        %537 = vmatmul.mubr.bf16.gmra.mxu0 %v479
        %v538 = vpop.f32.mrf.mxu0
        %v539 = vadd.f32 0.0, %v538
        %v540 = vpop.f32.mrf.mxu0
        %v541 = vadd.f32 0.0, %v540
        %v542 = vpop.f32.mrf.mxu0
        %v543 = vadd.f32 0.0, %v542
        %v544 = vpop.f32.mrf.mxu0
        %v545 = vadd.f32 0.0, %v544
        %546 = vmatprep.mubr.bf16.mxu0 0
        %547 = vmatmul.mubr.bf16.gmra.mxu0 %v482
        %v548 = vpop.f32.mrf.mxu0
        %v549 = vadd.f32 0.0, %v548
        %v550 = vpop.f32.mrf.mxu0
        %v551 = vadd.f32 0.0, %v550
        %v552 = vpop.f32.mrf.mxu0
        %v553 = vadd.f32 0.0, %v552
        %v554 = vpop.f32.mrf.mxu0
        %v555 = vadd.f32 0.0, %v554
        %556 = vdwg.mxu0
        %v557 = vpack.c.bf16 %v523, %v519
        %v558 = vpack.c.bf16 %v525, %v521
        %v559 = vpack.c.bf16 %v533, %v529
        %v560 = vpack.c.bf16 %v535, %v531
        %v561 = vpack.c.bf16 %v543, %v539
        %v562 = vpack.c.bf16 %v545, %v541
        %v563 = vpack.c.bf16 %v553, %v549
        %v564 = vpack.c.bf16 %v555, %v551
        %v565 = vld [vmem:[%s5] sm:$0xf]
        %v566 = vld [vmem:[%s5 + $0x4] sm:$0xf]
        %v567 = vld [vmem:[%s5 + $0x8] sm:$0xf]
        %v568 = vld [vmem:[%s5 + $0xc] sm:$0xf]
        %v569 = vld [vmem:[%s5 + $0x10] sm:$0xf]
        %v570 = vld [vmem:[%s5 + $0x14] sm:$0xf]
        %v571 = vld [vmem:[%s5 + $0x18] sm:$0xf]
        %v572 = vld [vmem:[%s5 + $0x1c] sm:$0xf]
        %v581 = vunpack.c.l.b16 %v565
        %v582 = vunpack.c.l.b16 %v566
        %v583 = vunpack.c.l.b16 %v567
        %v584 = vunpack.c.l.b16 %v568
        %v585 = vunpack.c.l.b16 %v569
        %v586 = vunpack.c.l.b16 %v570
        %v587 = vunpack.c.l.b16 %v571
        %v588 = vunpack.c.l.b16 %v572
        %v589 = vpack.c.b16 %v582, %v581
        %v590 = vpack.c.b16 %v584, %v583
        %v591 = vpack.c.b16 %v586, %v585
        %v592 = vpack.c.b16 %v588, %v587
        %vm593 = vcmask 523264
        %v595 = vsel %vm593, %v589, 0
        %v598 = vsel %vm593, %v590, 0
        %v601 = vsel %vm593, %v591, 0
        %v604 = vsel %vm593, %v592, 0
        %606 = vmatprep.subr.bf16.mxu0 0
        %607 = vmatpush1.bf16.msra.mxu0 0
        %608 = vmatprep.subr.bf16.mxu0 0
        %609 = vmatpush1.bf16.msra.mxu0 0
        %610 = vmatprep.subr.bf16.mxu0 0
        %611 = vmatpush1.bf16.msra.mxu0 0
        %612 = vmatprep.subr.bf16.mxu0 0
        %613 = vmatpush1.bf16.msra.mxu0 0
        %614 = vmatprep.subr.bf16.mxu0 %v564
        %615 = vmatpush1.bf16.msra.mxu0 %v563
        %616 = vmatprep.subr.bf16.mxu0 %v562
        %617 = vmatpush1.bf16.msra.mxu0 %v561
        %618 = vmatprep.subr.bf16.mxu0 %v560
        %619 = vmatpush1.bf16.msra.mxu0 %v559
        %620 = vmatprep.subr.bf16.mxu0 %v558
        %621 = vmatpush1.bf16.msra.mxu0 %v557
        %622 = vmatprep.subr.bf16.mxu0 0
        %623 = vmatpush2.bf16.msra.mxu0 0
        %624 = vmatprep.subr.bf16.mxu0 0
        %625 = vmatpush2.bf16.msra.mxu0 0
        %626 = vmatprep.subr.bf16.mxu0 0
        %627 = vmatpush2.bf16.msra.mxu0 0
        %628 = vmatprep.subr.bf16.mxu0 0
        %629 = vmatpush2.bf16.msra.mxu0 0
        %630 = vmatprep.subr.bf16.mxu0 0
        %631 = vmatpush2.bf16.msra.mxu0 0
        %632 = vmatprep.subr.bf16.mxu0 0
        %633 = vmatpush2.bf16.msra.mxu0 0
        %634 = vmatprep.subr.bf16.mxu0 0
        %635 = vmatpush2.bf16.msra.mxu0 0
        %636 = vmatprep.subr.bf16.mxu0 0
        %637 = vmatpush2.bf16.msra.mxu0 0
        %638 = vmatprep.mubr.bf16.mxu0 0
        %639 = vmatmul.mubr.bf16.gmra.mxu0 %v595
        %v640 = vpop.f32.mrf.mxu0
        %v641 = vadd.f32 0.0, %v640
        %v642 = vpop.f32.mrf.mxu0
        %v643 = vadd.f32 0.0, %v642
        %v644 = vpop.f32.mrf.mxu0
        %v645 = vadd.f32 0.0, %v644
        %v646 = vpop.f32.mrf.mxu0
        %v647 = vadd.f32 0.0, %v646
        %648 = vmatprep.mubr.bf16.mxu0 0
        %649 = vmatmul.mubr.bf16.gmra.mxu0 %v598
        %v650 = vpop.f32.mrf.mxu0
        %v651 = vadd.f32 0.0, %v650
        %v652 = vpop.f32.mrf.mxu0
        %v653 = vadd.f32 0.0, %v652
        %v654 = vpop.f32.mrf.mxu0
        %v655 = vadd.f32 0.0, %v654
        %v656 = vpop.f32.mrf.mxu0
        %v657 = vadd.f32 0.0, %v656
        %658 = vmatprep.mubr.bf16.mxu0 0
        %659 = vmatmul.mubr.bf16.gmra.mxu0 %v601
        %v660 = vpop.f32.mrf.mxu0
        %v661 = vadd.f32 0.0, %v660
        %v662 = vpop.f32.mrf.mxu0
        %v663 = vadd.f32 0.0, %v662
        %v664 = vpop.f32.mrf.mxu0
        %v665 = vadd.f32 0.0, %v664
        %v666 = vpop.f32.mrf.mxu0
        %v667 = vadd.f32 0.0, %v666
        %668 = vmatprep.mubr.bf16.mxu0 0
        %669 = vmatmul.mubr.bf16.gmra.mxu0 %v604
        %v670 = vpop.f32.mrf.mxu0
        %v671 = vadd.f32 0.0, %v670
        %v672 = vpop.f32.mrf.mxu0
        %v673 = vadd.f32 0.0, %v672
        %v674 = vpop.f32.mrf.mxu0
        %v675 = vadd.f32 0.0, %v674
        %v676 = vpop.f32.mrf.mxu0
        %v677 = vadd.f32 0.0, %v676
        %678 = vdwg.mxu0
        %v679 = vld [vmem:[#allocation6] sm:$0xf]
        %v680 = vld [vmem:[#allocation6 + $0x4] sm:$0xf]
        %v681 = vld [vmem:[#allocation6 + $0x8] sm:$0xf]
        %v682 = vld [vmem:[#allocation6 + $0xc] sm:$0xf]
        %v683 = vld [vmem:[#allocation6 + $0x10] sm:$0xf]
        %v684 = vld [vmem:[#allocation6 + $0x14] sm:$0xf]
        %v685 = vld [vmem:[#allocation6 + $0x18] sm:$0xf]
        %v686 = vld [vmem:[#allocation6 + $0x1c] sm:$0xf]
        %v695 = vunpack.c.l.b16 %v679
        %v696 = vunpack.c.l.b16 %v680
        %v697 = vunpack.c.l.b16 %v681
        %v698 = vunpack.c.l.b16 %v682
        %v699 = vunpack.c.l.b16 %v683
        %v700 = vunpack.c.l.b16 %v684
        %v701 = vunpack.c.l.b16 %v685
        %v702 = vunpack.c.l.b16 %v686
        %v703 = vpack.c.b16 %v696, %v695
        %v704 = vpack.c.b16 %v698, %v697
        %v705 = vpack.c.b16 %v700, %v699
        %v706 = vpack.c.b16 %v702, %v701
        %v708 = vsel %vm593, %v703, 0
        %v711 = vsel %vm593, %v704, 0
        %v714 = vsel %vm593, %v705, 0
        %v717 = vsel %vm593, %v706, 0
        %719 = vmatprep.subr.bf16.mxu0 0
        %720 = vmatpush1.bf16.msra.mxu0 0
        %721 = vmatprep.subr.bf16.mxu0 0
        %722 = vmatpush1.bf16.msra.mxu0 0
        %723 = vmatprep.subr.bf16.mxu0 0
        %724 = vmatpush1.bf16.msra.mxu0 0
        %725 = vmatprep.subr.bf16.mxu0 0
        %726 = vmatpush1.bf16.msra.mxu0 0
        %727 = vmatprep.subr.bf16.mxu0 %v564
        %728 = vmatpush1.bf16.msra.mxu0 %v563
        %729 = vmatprep.subr.bf16.mxu0 %v562
        %730 = vmatpush1.bf16.msra.mxu0 %v561
        %731 = vmatprep.subr.bf16.mxu0 %v560
        %732 = vmatpush1.bf16.msra.mxu0 %v559
        %733 = vmatprep.subr.bf16.mxu0 %v558
        %734 = vmatpush1.bf16.msra.mxu0 %v557
        %735 = vmatprep.subr.bf16.mxu0 0
        %736 = vmatpush2.bf16.msra.mxu0 0
        %737 = vmatprep.subr.bf16.mxu0 0
        %738 = vmatpush2.bf16.msra.mxu0 0
        %739 = vmatprep.subr.bf16.mxu0 0
        %740 = vmatpush2.bf16.msra.mxu0 0
        %741 = vmatprep.subr.bf16.mxu0 0
        %742 = vmatpush2.bf16.msra.mxu0 0
        %743 = vmatprep.subr.bf16.mxu0 0
        %744 = vmatpush2.bf16.msra.mxu0 0
        %745 = vmatprep.subr.bf16.mxu0 0
        %746 = vmatpush2.bf16.msra.mxu0 0
        %747 = vmatprep.subr.bf16.mxu0 0
        %748 = vmatpush2.bf16.msra.mxu0 0
        %749 = vmatprep.subr.bf16.mxu0 0
        %750 = vmatpush2.bf16.msra.mxu0 0
        %751 = vmatprep.mubr.bf16.mxu0 0
        %752 = vmatmul.mubr.bf16.gmra.mxu0 %v708
        %v753 = vpop.f32.mrf.mxu0
        %v754 = vadd.f32 0.0, %v753
        %v755 = vpop.f32.mrf.mxu0
        %v756 = vadd.f32 0.0, %v755
        %v757 = vpop.f32.mrf.mxu0
        %v758 = vadd.f32 0.0, %v757
        %v759 = vpop.f32.mrf.mxu0
        %v760 = vadd.f32 0.0, %v759
        %761 = vmatprep.mubr.bf16.mxu0 0
        %762 = vmatmul.mubr.bf16.gmra.mxu0 %v711
        %v763 = vpop.f32.mrf.mxu0
        %v764 = vadd.f32 0.0, %v763
        %v765 = vpop.f32.mrf.mxu0
        %v766 = vadd.f32 0.0, %v765
        %v767 = vpop.f32.mrf.mxu0
        %v768 = vadd.f32 0.0, %v767
        %v769 = vpop.f32.mrf.mxu0
        %v770 = vadd.f32 0.0, %v769
        %771 = vmatprep.mubr.bf16.mxu0 0
        %772 = vmatmul.mubr.bf16.gmra.mxu0 %v714
        %v773 = vpop.f32.mrf.mxu0
        %v774 = vadd.f32 0.0, %v773
        %v775 = vpop.f32.mrf.mxu0
        %v776 = vadd.f32 0.0, %v775
        %v777 = vpop.f32.mrf.mxu0
        %v778 = vadd.f32 0.0, %v777
        %v779 = vpop.f32.mrf.mxu0
        %v780 = vadd.f32 0.0, %v779
        %781 = vmatprep.mubr.bf16.mxu0 0
        %782 = vmatmul.mubr.bf16.gmra.mxu0 %v717
        %v783 = vpop.f32.mrf.mxu0
        %v784 = vadd.f32 0.0, %v783
        %v785 = vpop.f32.mrf.mxu0
        %v786 = vadd.f32 0.0, %v785
        %v787 = vpop.f32.mrf.mxu0
        %v788 = vadd.f32 0.0, %v787
        %v789 = vpop.f32.mrf.mxu0
        %v790 = vadd.f32 0.0, %v789
        %791 = vdwg.mxu0
        %v792 = vsub.f32 %v641, %v756
        %v793 = vsub.f32 %v645, %v760
        %v794 = vsub.f32 %v651, %v766
        %v795 = vsub.f32 %v655, %v770
        %v796 = vsub.f32 %v661, %v776
        %v797 = vsub.f32 %v665, %v780
        %v798 = vsub.f32 %v671, %v786
        %v799 = vsub.f32 %v675, %v790
        %v800 = vadd.f32 %v643, %v754
        %v801 = vadd.f32 %v647, %v758
        %v802 = vadd.f32 %v653, %v764
        %v803 = vadd.f32 %v657, %v768
        %v804 = vadd.f32 %v663, %v774
        %v805 = vadd.f32 %v667, %v778
        %v806 = vadd.f32 %v673, %v784
        %v807 = vadd.f32 %v677, %v788
        %v808 = vld [vmem:[%s419] sm:$0xff]
        %v809 = vld [vmem:[%s419 + $0x8] sm:$0xff]
        %v810 = vld [vmem:[%s419 + $0x10] sm:$0xff]
        %v811 = vld [vmem:[%s419 + $0x18] sm:$0xff]
        %v812 = vld [vmem:[%s419 + $0x20] sm:$0xff]
        %v813 = vld [vmem:[%s419 + $0x28] sm:$0xff]
        %v814 = vld [vmem:[%s419 + $0x30] sm:$0xff]
        %v815 = vld [vmem:[%s419 + $0x38] sm:$0xff]
        %v816 = vld [vmem:[#allocation2] sm:$0xff]
        %v817 = vld [vmem:[#allocation2 + $0x8] sm:$0xff]
        %v818 = vld [vmem:[#allocation2 + $0x10] sm:$0xff]
        %v819 = vld [vmem:[#allocation2 + $0x18] sm:$0xff]
        %v820 = vld [vmem:[#allocation2 + $0x20] sm:$0xff]
        %v821 = vld [vmem:[#allocation2 + $0x28] sm:$0xff]
        %v822 = vld [vmem:[#allocation2 + $0x30] sm:$0xff]
        %v823 = vld [vmem:[#allocation2 + $0x38] sm:$0xff]
        %v824 = vmul.f32 %v792, %v808
        %v825 = vmul.f32 %v793, %v809
        %v826 = vmul.f32 %v794, %v810
        %v827 = vmul.f32 %v795, %v811
        %v828 = vmul.f32 %v796, %v812
        %v829 = vmul.f32 %v797, %v813
        %v830 = vmul.f32 %v798, %v814
        %v831 = vmul.f32 %v799, %v815
        %v832 = vmul.f32 %v800, %v816
        %v833 = vmul.f32 %v801, %v817
        %v834 = vmul.f32 %v802, %v818
        %v835 = vmul.f32 %v803, %v819
        %v836 = vmul.f32 %v804, %v820
        %v837 = vmul.f32 %v805, %v821
        %v838 = vmul.f32 %v806, %v822
        %v839 = vmul.f32 %v807, %v823
        %v840 = vsub.f32 %v824, %v832
        %v841 = vsub.f32 %v825, %v833
        %v842 = vsub.f32 %v826, %v834
        %v843 = vsub.f32 %v827, %v835
        %v844 = vsub.f32 %v828, %v836
        %v845 = vsub.f32 %v829, %v837
        %v846 = vsub.f32 %v830, %v838
        %v847 = vsub.f32 %v831, %v839
        %v848 = vmul.f32 %v792, %v816
        %v849 = vmul.f32 %v793, %v817
        %v850 = vmul.f32 %v794, %v818
        %v851 = vmul.f32 %v795, %v819
        %v852 = vmul.f32 %v796, %v820
        %v853 = vmul.f32 %v797, %v821
        %v854 = vmul.f32 %v798, %v822
        %v855 = vmul.f32 %v799, %v823
        %v856 = vmul.f32 %v800, %v808
        %v857 = vmul.f32 %v801, %v809
        %v858 = vmul.f32 %v802, %v810
        %v859 = vmul.f32 %v803, %v811
        %v860 = vmul.f32 %v804, %v812
        %v861 = vmul.f32 %v805, %v813
        %v862 = vmul.f32 %v806, %v814
        %v863 = vmul.f32 %v807, %v815
        %v864 = vadd.f32 %v848, %v856
        %v865 = vadd.f32 %v849, %v857
        %v866 = vadd.f32 %v850, %v858
        %v867 = vadd.f32 %v851, %v859
        %v868 = vadd.f32 %v852, %v860
        %v869 = vadd.f32 %v853, %v861
        %v870 = vadd.f32 %v854, %v862
        %v871 = vadd.f32 %v855, %v863
        %v872 = vpack.c.bf16 %v841, %v840
        %v873 = vpack.c.bf16 %v865, %v864
        %v874 = vpack.c.bf16 %v843, %v842
        %v875 = vpack.c.bf16 %v867, %v866
        %v876 = vpack.c.bf16 %v845, %v844
        %v877 = vpack.c.bf16 %v869, %v868
        %v878 = vpack.c.bf16 %v847, %v846
        %v879 = vpack.c.bf16 %v871, %v870
        %880 = vmatprep.subr.bf16.mxu0 0
        %881 = vmatpush1.bf16.msra.mxu0 0
        %882 = vmatprep.subr.bf16.mxu0 0
        %883 = vmatpush1.bf16.msra.mxu0 0
        %884 = vmatprep.subr.bf16.mxu0 0
        %885 = vmatpush1.bf16.msra.mxu0 0
        %886 = vmatprep.subr.bf16.mxu0 0
        %887 = vmatpush1.bf16.msra.mxu0 0
        %888 = vmatprep.subr.bf16.mxu0 %v879
        %889 = vmatpush1.bf16.msra.mxu0 %v878
        %890 = vmatprep.subr.bf16.mxu0 %v877
        %891 = vmatpush1.bf16.msra.mxu0 %v876
        %892 = vmatprep.subr.bf16.mxu0 %v875
        %893 = vmatpush1.bf16.msra.mxu0 %v874
        %894 = vmatprep.subr.bf16.mxu0 %v873
        %895 = vmatpush1.bf16.msra.mxu0 %v872
        %896 = vmatprep.subr.bf16.mxu0 0
        %897 = vmatpush2.bf16.msra.mxu0 0
        %898 = vmatprep.subr.bf16.mxu0 0
        %899 = vmatpush2.bf16.msra.mxu0 0
        %900 = vmatprep.subr.bf16.mxu0 0
        %901 = vmatpush2.bf16.msra.mxu0 0
        %902 = vmatprep.subr.bf16.mxu0 0
        %903 = vmatpush2.bf16.msra.mxu0 0
        %904 = vmatprep.subr.bf16.mxu0 0
        %905 = vmatpush2.bf16.msra.mxu0 0
        %906 = vmatprep.subr.bf16.mxu0 0
        %907 = vmatpush2.bf16.msra.mxu0 0
        %908 = vmatprep.subr.bf16.mxu0 0
        %909 = vmatpush2.bf16.msra.mxu0 0
        %910 = vmatprep.subr.bf16.mxu0 0
        %911 = vmatpush2.bf16.msra.mxu0 0
        %912 = vmatprep.mubr.bf16.mxu0 0
        %913 = vmatmul.mubr.bf16.gmra.mxu0 %v595
        %v914 = vpop.f32.mrf.mxu0
        %v915 = vadd.f32 0.0, %v914
        %v916 = vpop.f32.mrf.mxu0
        %v917 = vadd.f32 0.0, %v916
        %v918 = vpop.f32.mrf.mxu0
        %v919 = vadd.f32 0.0, %v918
        %v920 = vpop.f32.mrf.mxu0
        %v921 = vadd.f32 0.0, %v920
        %922 = vmatprep.mubr.bf16.mxu0 0
        %923 = vmatmul.mubr.bf16.gmra.mxu0 %v598
        %v924 = vpop.f32.mrf.mxu0
        %v925 = vadd.f32 0.0, %v924
        %v926 = vpop.f32.mrf.mxu0
        %v927 = vadd.f32 0.0, %v926
        %v928 = vpop.f32.mrf.mxu0
        %v929 = vadd.f32 0.0, %v928
        %v930 = vpop.f32.mrf.mxu0
        %v931 = vadd.f32 0.0, %v930
        %932 = vmatprep.mubr.bf16.mxu0 0
        %933 = vmatmul.mubr.bf16.gmra.mxu0 %v601
        %v934 = vpop.f32.mrf.mxu0
        %v935 = vadd.f32 0.0, %v934
        %v936 = vpop.f32.mrf.mxu0
        %v937 = vadd.f32 0.0, %v936
        %v938 = vpop.f32.mrf.mxu0
        %v939 = vadd.f32 0.0, %v938
        %v940 = vpop.f32.mrf.mxu0
        %v941 = vadd.f32 0.0, %v940
        %942 = vmatprep.mubr.bf16.mxu0 0
        %943 = vmatmul.mubr.bf16.gmra.mxu0 %v604
        %v944 = vpop.f32.mrf.mxu0
        %v945 = vadd.f32 0.0, %v944
        %v946 = vpop.f32.mrf.mxu0
        %v947 = vadd.f32 0.0, %v946
        %v948 = vpop.f32.mrf.mxu0
        %v949 = vadd.f32 0.0, %v948
        %v950 = vpop.f32.mrf.mxu0
        %v951 = vadd.f32 0.0, %v950
        %952 = vdwg.mxu0
        %953 = vmatprep.subr.bf16.mxu0 0
        %954 = vmatpush1.bf16.msra.mxu0 0
        %955 = vmatprep.subr.bf16.mxu0 0
        %956 = vmatpush1.bf16.msra.mxu0 0
        %957 = vmatprep.subr.bf16.mxu0 0
        %958 = vmatpush1.bf16.msra.mxu0 0
        %959 = vmatprep.subr.bf16.mxu0 0
        %960 = vmatpush1.bf16.msra.mxu0 0
        %961 = vmatprep.subr.bf16.mxu0 %v879
        %962 = vmatpush1.bf16.msra.mxu0 %v878
        %963 = vmatprep.subr.bf16.mxu0 %v877
        %964 = vmatpush1.bf16.msra.mxu0 %v876
        %965 = vmatprep.subr.bf16.mxu0 %v875
        %966 = vmatpush1.bf16.msra.mxu0 %v874
        %967 = vmatprep.subr.bf16.mxu0 %v873
        %968 = vmatpush1.bf16.msra.mxu0 %v872
        %969 = vmatprep.subr.bf16.mxu0 0
        %970 = vmatpush2.bf16.msra.mxu0 0
        %971 = vmatprep.subr.bf16.mxu0 0
        %972 = vmatpush2.bf16.msra.mxu0 0
        %973 = vmatprep.subr.bf16.mxu0 0
        %974 = vmatpush2.bf16.msra.mxu0 0
        %975 = vmatprep.subr.bf16.mxu0 0
        %976 = vmatpush2.bf16.msra.mxu0 0
        %977 = vmatprep.subr.bf16.mxu0 0
        %978 = vmatpush2.bf16.msra.mxu0 0
        %979 = vmatprep.subr.bf16.mxu0 0
        %980 = vmatpush2.bf16.msra.mxu0 0
        %981 = vmatprep.subr.bf16.mxu0 0
        %982 = vmatpush2.bf16.msra.mxu0 0
        %983 = vmatprep.subr.bf16.mxu0 0
        %984 = vmatpush2.bf16.msra.mxu0 0
        %985 = vmatprep.mubr.bf16.mxu0 0
        %986 = vmatmul.mubr.bf16.gmra.mxu0 %v708
        %v987 = vpop.f32.mrf.mxu0
        %v988 = vadd.f32 0.0, %v987
        %v989 = vpop.f32.mrf.mxu0
        %v990 = vadd.f32 0.0, %v989
        %v991 = vpop.f32.mrf.mxu0
        %v992 = vadd.f32 0.0, %v991
        %v993 = vpop.f32.mrf.mxu0
        %v994 = vadd.f32 0.0, %v993
        %995 = vmatprep.mubr.bf16.mxu0 0
        %996 = vmatmul.mubr.bf16.gmra.mxu0 %v711
        %v997 = vpop.f32.mrf.mxu0
        %v998 = vadd.f32 0.0, %v997
        %v999 = vpop.f32.mrf.mxu0
        %v1000 = vadd.f32 0.0, %v999
        %v1001 = vpop.f32.mrf.mxu0
        %v1002 = vadd.f32 0.0, %v1001
        %v1003 = vpop.f32.mrf.mxu0
        %v1004 = vadd.f32 0.0, %v1003
        %1005 = vmatprep.mubr.bf16.mxu0 0
        %1006 = vmatmul.mubr.bf16.gmra.mxu0 %v714
        %v1007 = vpop.f32.mrf.mxu0
        %v1008 = vadd.f32 0.0, %v1007
        %v1009 = vpop.f32.mrf.mxu0
        %v1010 = vadd.f32 0.0, %v1009
        %v1011 = vpop.f32.mrf.mxu0
        %v1012 = vadd.f32 0.0, %v1011
        %v1013 = vpop.f32.mrf.mxu0
        %v1014 = vadd.f32 0.0, %v1013
        %1015 = vmatprep.mubr.bf16.mxu0 0
        %1016 = vmatmul.mubr.bf16.gmra.mxu0 %v717
        %v1017 = vpop.f32.mrf.mxu0
        %v1018 = vadd.f32 0.0, %v1017
        %v1019 = vpop.f32.mrf.mxu0
        %v1020 = vadd.f32 0.0, %v1019
        %v1021 = vpop.f32.mrf.mxu0
        %v1022 = vadd.f32 0.0, %v1021
        %v1023 = vpop.f32.mrf.mxu0
        %v1024 = vadd.f32 0.0, %v1023
        %1025 = vdwg.mxu0
        %v1026 = vadd.f32 %v915, %v990
        %v1027 = vadd.f32 %v919, %v994
        %v1028 = vadd.f32 %v925, %v1000
        %v1029 = vadd.f32 %v929, %v1004
        %v1030 = vadd.f32 %v935, %v1010
        %v1031 = vadd.f32 %v939, %v1014
        %v1032 = vadd.f32 %v945, %v1020
        %v1033 = vadd.f32 %v949, %v1024
        %v1034 = vsub.f32 %v917, %v988
        %v1035 = vsub.f32 %v921, %v992
        %v1036 = vsub.f32 %v927, %v998
        %v1037 = vsub.f32 %v931, %v1002
        %v1038 = vsub.f32 %v937, %v1008
        %v1039 = vsub.f32 %v941, %v1012
        %v1040 = vsub.f32 %v947, %v1018
        %v1041 = vsub.f32 %v951, %v1022
        %v1042 = vpack.c.bf16 %v1027, %v1026
        %v1043 = vpack.c.bf16 %v1035, %v1034
        %v1044 = vpack.c.bf16 %v1029, %v1028
        %v1045 = vpack.c.bf16 %v1037, %v1036
        %v1046 = vpack.c.bf16 %v1031, %v1030
        %v1047 = vpack.c.bf16 %v1039, %v1038
        %v1048 = vpack.c.bf16 %v1033, %v1032
        %v1049 = vpack.c.bf16 %v1041, %v1040
        %v1050 = vld [vmem:[%s7] sm:$0xf]
        %v1051 = vld [vmem:[%s7 + $0x4] sm:$0xf]
        %v1052 = vld [vmem:[%s7 + $0x8] sm:$0xf]
        %v1053 = vld [vmem:[%s7 + $0xc] sm:$0xf]
        %v1054 = vld [vmem:[%s7 + $0x10] sm:$0xf]
        %v1055 = vld [vmem:[%s7 + $0x14] sm:$0xf]
        %v1056 = vld [vmem:[%s7 + $0x18] sm:$0xf]
        %v1057 = vld [vmem:[%s7 + $0x1c] sm:$0xf]
        %v1058 = vld [vmem:[%s7 + $0x20] sm:$0xf]
        %v1059 = vld [vmem:[%s7 + $0x24] sm:$0xf]
        %v1060 = vld [vmem:[%s7 + $0x28] sm:$0xf]
        %v1061 = vld [vmem:[%s7 + $0x2c] sm:$0xf]
        %v1062 = vld [vmem:[%s7 + $0x30] sm:$0xf]
        %v1063 = vld [vmem:[%s7 + $0x34] sm:$0xf]
        %v1064 = vld [vmem:[%s7 + $0x38] sm:$0xf]
        %v1065 = vld [vmem:[%s7 + $0x3c] sm:$0xf]
        %v1066 = vld [vmem:[%s7 + $0x40] sm:$0xf]
        %v1067 = vld [vmem:[%s7 + $0x44] sm:$0xf]
        %v1068 = vld [vmem:[%s7 + $0x48] sm:$0xf]
        %v1069 = vld [vmem:[%s7 + $0x4c] sm:$0xf]
        %v1070 = vld [vmem:[%s7 + $0x50] sm:$0xf]
        %v1071 = vld [vmem:[%s7 + $0x54] sm:$0xf]
        %v1072 = vld [vmem:[%s7 + $0x58] sm:$0xf]
        %v1073 = vld [vmem:[%s7 + $0x5c] sm:$0xf]
        %v1074 = vld [vmem:[%s7 + $0x60] sm:$0xf]
        %v1075 = vld [vmem:[%s7 + $0x64] sm:$0xf]
        %v1076 = vld [vmem:[%s7 + $0x68] sm:$0xf]
        %v1077 = vld [vmem:[%s7 + $0x6c] sm:$0xf]
        %v1078 = vld [vmem:[%s7 + $0x70] sm:$0xf]
        %v1079 = vld [vmem:[%s7 + $0x74] sm:$0xf]
        %v1080 = vld [vmem:[%s7 + $0x78] sm:$0xf]
        %v1081 = vld [vmem:[%s7 + $0x7c] sm:$0xf]
        %v1114 = vunpack.c.l.b16 %v1050
        %v1115 = vunpack.c.l.b16 %v1051
        %v1116 = vunpack.c.l.b16 %v1052
        %v1117 = vunpack.c.l.b16 %v1053
        %v1118 = vunpack.c.l.b16 %v1054
        %v1119 = vunpack.c.l.b16 %v1055
        %v1120 = vunpack.c.l.b16 %v1056
        %v1121 = vunpack.c.l.b16 %v1057
        %v1122 = vunpack.c.l.b16 %v1058
        %v1123 = vunpack.c.l.b16 %v1059
        %v1124 = vunpack.c.l.b16 %v1060
        %v1125 = vunpack.c.l.b16 %v1061
        %v1126 = vunpack.c.l.b16 %v1062
        %v1127 = vunpack.c.l.b16 %v1063
        %v1128 = vunpack.c.l.b16 %v1064
        %v1129 = vunpack.c.l.b16 %v1065
        %v1130 = vunpack.c.l.b16 %v1066
        %v1131 = vunpack.c.l.b16 %v1067
        %v1132 = vunpack.c.l.b16 %v1068
        %v1133 = vunpack.c.l.b16 %v1069
        %v1134 = vunpack.c.l.b16 %v1070
        %v1135 = vunpack.c.l.b16 %v1071
        %v1136 = vunpack.c.l.b16 %v1072
        %v1137 = vunpack.c.l.b16 %v1073
        %v1138 = vunpack.c.l.b16 %v1074
        %v1139 = vunpack.c.l.b16 %v1075
        %v1140 = vunpack.c.l.b16 %v1076
        %v1141 = vunpack.c.l.b16 %v1077
        %v1142 = vunpack.c.l.b16 %v1078
        %v1143 = vunpack.c.l.b16 %v1079
        %v1144 = vunpack.c.l.b16 %v1080
        %v1145 = vunpack.c.l.b16 %v1081
        %v1146 = vpack.c.b16 %v1115, %v1114
        %v1147 = vpack.c.b16 %v1117, %v1116
        %v1148 = vpack.c.b16 %v1119, %v1118
        %v1149 = vpack.c.b16 %v1121, %v1120
        %v1150 = vpack.c.b16 %v1123, %v1122
        %v1151 = vpack.c.b16 %v1125, %v1124
        %v1152 = vpack.c.b16 %v1127, %v1126
        %v1153 = vpack.c.b16 %v1129, %v1128
        %v1154 = vpack.c.b16 %v1131, %v1130
        %v1155 = vpack.c.b16 %v1133, %v1132
        %v1156 = vpack.c.b16 %v1135, %v1134
        %v1157 = vpack.c.b16 %v1137, %v1136
        %v1158 = vpack.c.b16 %v1139, %v1138
        %v1159 = vpack.c.b16 %v1141, %v1140
        %v1160 = vpack.c.b16 %v1143, %v1142
        %v1161 = vpack.c.b16 %v1145, %v1144
        %1178 = vmatprep.subr.bf16.mxu0 0
        %1179 = vmatpush1.bf16.msra.mxu0 %v1153
        %1180 = vmatprep.subr.bf16.mxu0 0
        %1181 = vmatpush1.bf16.msra.mxu0 %v1152
        %1182 = vmatprep.subr.bf16.mxu0 0
        %1183 = vmatpush1.bf16.msra.mxu0 %v1151
        %1184 = vmatprep.subr.bf16.mxu0 0
        %1185 = vmatpush1.bf16.msra.mxu0 %v1150
        %1186 = vmatprep.subr.bf16.mxu0 0
        %1187 = vmatpush1.bf16.msra.mxu0 %v1149
        %1188 = vmatprep.subr.bf16.mxu0 0
        %1189 = vmatpush1.bf16.msra.mxu0 %v1148
        %1190 = vmatprep.subr.bf16.mxu0 0
        %1191 = vmatpush1.bf16.msra.mxu0 %v1147
        %1192 = vmatprep.subr.bf16.mxu0 0
        %1193 = vmatpush1.bf16.msra.mxu0 %v1146
        %1194 = vmatprep.subr.bf16.mxu0 0
        %1195 = vmatpush2.bf16.msra.mxu0 %v1161
        %1196 = vmatprep.subr.bf16.mxu0 0
        %1197 = vmatpush2.bf16.msra.mxu0 %v1160
        %1198 = vmatprep.subr.bf16.mxu0 0
        %1199 = vmatpush2.bf16.msra.mxu0 %v1159
        %1200 = vmatprep.subr.bf16.mxu0 0
        %1201 = vmatpush2.bf16.msra.mxu0 %v1158
        %1202 = vmatprep.subr.bf16.mxu0 0
        %1203 = vmatpush2.bf16.msra.mxu0 %v1157
        %1204 = vmatprep.subr.bf16.mxu0 0
        %1205 = vmatpush2.bf16.msra.mxu0 %v1156
        %1206 = vmatprep.subr.bf16.mxu0 0
        %1207 = vmatpush2.bf16.msra.mxu0 %v1155
        %1208 = vmatprep.subr.bf16.mxu0 0
        %1209 = vmatpush2.bf16.msra.mxu0 %v1154
        %1210 = vmatprep.mubr.bf16.mxu0 %v1043
        %1211 = vmatmul.mubr.bf16.gmra.mxu0 %v1042
        %v1212 = vpop.f32.mrf.mxu0
        %v1213 = vadd.f32 0.0, %v1212
        %v1214 = vpop.f32.mrf.mxu0
        %v1215 = vpop.f32.mrf.mxu0
        %v1216 = vadd.f32 0.0, %v1215
        %v1217 = vpop.f32.mrf.mxu0
        %1218 = vmatprep.mubr.bf16.mxu0 %v1045
        %1219 = vmatmul.mubr.bf16.gmra.mxu0 %v1044
        %v1220 = vpop.f32.mrf.mxu0
        %v1221 = vadd.f32 0.0, %v1220
        %v1222 = vpop.f32.mrf.mxu0
        %v1223 = vpop.f32.mrf.mxu0
        %v1224 = vadd.f32 0.0, %v1223
        %v1225 = vpop.f32.mrf.mxu0
        %1226 = vmatprep.mubr.bf16.mxu0 %v1047
        %1227 = vmatmul.mubr.bf16.gmra.mxu0 %v1046
        %v1228 = vpop.f32.mrf.mxu0
        %v1229 = vadd.f32 0.0, %v1228
        %v1230 = vpop.f32.mrf.mxu0
        %v1231 = vpop.f32.mrf.mxu0
        %v1232 = vadd.f32 0.0, %v1231
        %v1233 = vpop.f32.mrf.mxu0
        %1234 = vmatprep.mubr.bf16.mxu0 %v1049
        %1235 = vmatmul.mubr.bf16.gmra.mxu0 %v1048
        %v1236 = vpop.f32.mrf.mxu0
        %v1237 = vadd.f32 0.0, %v1236
        %v1238 = vpop.f32.mrf.mxu0
        %v1239 = vpop.f32.mrf.mxu0
        %v1240 = vadd.f32 0.0, %v1239
        %v1241 = vpop.f32.mrf.mxu0
        %1242 = vdwg.mxu0
        %v1243 = vpack.c.bf16 %v1216, %v1213
        %v1244 = vpack.c.bf16 %v1224, %v1221
        %v1245 = vpack.c.bf16 %v1232, %v1229
        %v1246 = vpack.c.bf16 %v1240, %v1237
        %v1251 = vunpack.c.l.b16 %v1243
        %v1252 = vunpack.c.h.b16 %v1243
        %v1253 = vunpack.c.l.b16 %v1244
        %v1254 = vunpack.c.h.b16 %v1244
        %v1255 = vunpack.c.l.b16 %v1245
        %v1256 = vunpack.c.h.b16 %v1245
        %v1257 = vunpack.c.l.b16 %v1246
        %v1258 = vunpack.c.h.b16 %v1246
        %v1259 = vpack.c.b16 %v1251, %v1251
        %v1260 = vpack.c.b16 %v1252, %v1252
        %v1261 = vpack.c.b16 %v1253, %v1253
        %v1262 = vpack.c.b16 %v1254, %v1254
        %v1263 = vpack.c.b16 %v1255, %v1255
        %v1264 = vpack.c.b16 %v1256, %v1256
        %v1265 = vpack.c.b16 %v1257, %v1257
        %v1266 = vpack.c.b16 %v1258, %v1258
        %vm1275 = vcmask 125952
        %1276 = vst.msk [vmem:[%s427] sm:$0xf] %vm1275, %v1259
        %1277 = vst.msk [vmem:[%s427 + $0x4] sm:$0xf] %vm1275, %v1260
        %1278 = vst.msk [vmem:[%s427 + $0x8] sm:$0xf] %vm1275, %v1261
        %1279 = vst.msk [vmem:[%s427 + $0xc] sm:$0xf] %vm1275, %v1262
        %1280 = vst.msk [vmem:[%s427 + $0x10] sm:$0xf] %vm1275, %v1263
        %1281 = vst.msk [vmem:[%s427 + $0x14] sm:$0xf] %vm1275, %v1264
        %1282 = vst.msk [vmem:[%s427 + $0x18] sm:$0xf] %vm1275, %v1265
        %1283 = vst.msk [vmem:[%s427 + $0x1c] sm:$0xf] %vm1275, %v1266
        %s1284 = sadd.s32 %s26, %s25
        %s1285 = smul.u32 8, %s1284
        %p1286 = scmp.lt.s32.totalorder %s1285, 15
        %s1287 = scalar_select %p1286, %s1285, 15
        %s1288 = smul.addr %s1287, 4
        %s1289 = scalar_lea.vmem %s8, %s1288
        // Predicated region
        $region65: #{fwd.3} parent=51 // pred_check
          %p1290 = pneg %p243
        $region66: #{fwd.3} parent=51 // pred_check_branch
          %1292 = sbr.rel (%p1290) target = $region68
        $region67: #{fwd.3} parent=51 // pred_region
          %s1293 = sadd.s32 %s26, %s25
          %s1294 = smul.u32 8, %s1293
        $region68: #{fwd.3} parent=51 // pred_fallthru
          _
      $region52: #{fwd.3} parent=5 // pred_fallthru
        _
      %p1295 = scmp.le.s32.totalorder 2, %s16
      // Predicated region
      $region69: #{fwd.3} parent=5 // pred_check
        %p1296 = pneg %p1295
      $region70: #{fwd.3} parent=5 // pred_check_branch
        %1298 = sbr.rel (%p1296) target = $region72
      $region71: #{fwd.3} parent=5 // pred_region
        %s1299 = ssub.s32 %s16, 2
        // Predicated region
        $region73: #{fwd.3} parent=71 // pred_check
          %p1300 = pneg %p249
        $region74: #{fwd.3} parent=71 // pred_check_branch
          %1302 = sbr.rel (%p1300) target = $region76
        $region75: #{fwd.3} parent=71 // pred_region
          %s1303 = sadd.s32 %s28, %s27
          %s1304 = smul.u32 8, %s1303
          %p1305 = scmp.lt.s32.totalorder %s1304, 15
          %s1306 = scalar_select %p1305, %s1304, 15
          %s1307 = smul.addr %s1306, 4
          %s1308 = scalar_lea.vmem %s8, %s1307
        $region76: #{fwd.3} parent=71 // pred_fallthru
          _
      $region72: #{fwd.3} parent=5 // pred_fallthru
        _
    $region6: #{fwd.3} parent=1 // loop_footer
      %s20 = sadd.s32 1, %s16
    $region7: #{fwd.3} parent=1 // loop_footer_branch
      %15 = sbr.rel target = $region3
    $region8: #{fwd.3} parent=1 // loop_exit
      _
    %1309 = vsyncpa [#allocation3], 1
    %s1310 = scalar_lea.sflag [#allocation3], 1
    %1311 = vsyncpa %s1310, 1
    %1312 = vsyncpa [#allocation5], 1

// kernel: fwd.4
$region0: #{fwd.4}
  #allocation0 [shape = 'u32[]', space=smem, size = 0x4, offset = 0x4, fixed_abs, tag = 'smem constant byte address 0x4 - core index']
  #allocation1 [shape = 'u32[144,128]{1,0:T(1,128)}', space=vmem, size = 0x12000, scoped, tag = 'internal scratch']
  %s0 = inlined_call_operand.vmem [shape: bf16[32,64], index: 0, kind: input, shape index: {}]
  %s1 = inlined_call_operand.vmem [shape: bf16[64,128], index: 1, kind: input, shape index: {}]
  %s2 = inlined_call_operand.vmem [shape: bf16[32,128], index: 2, kind: output, shape index: {0}]
  %s3 = inlined_call_operand.vmem [shape: f32[1,2,128], index: 3, kind: output, shape index: {1}]
  %4 = xla_tuple %s2, %s3
  %s5 = sld [smem:[#allocation0]]
  $region26: #{fwd.4} parent=0
    _
  %s7 = ssub.s32 1, %s5
  %s8 = scalar_select 0, %s7, %s5
  // Predicated region
  $region2: #{fwd.4} parent=0 // pred_check
    _
  $region3: #{fwd.4} parent=0 // pred_check_branch
    %10 = sbr.rel (0) target = $region5
  $region4: #{fwd.4} parent=0 // pred_region
    _
  $region5: #{fwd.4} parent=0 // pred_fallthru
    _
  // Predicated region
  $region6: #{fwd.4} parent=0 // pred_check
    _
  $region7: #{fwd.4} parent=0 // pred_check_branch
    %12 = sbr.rel (0) target = $region9
  $region8: #{fwd.4} parent=0 // pred_region
    _
  $region9: #{fwd.4} parent=0 // pred_fallthru
    _
  %v14 = vld [vmem:[%s0] sm:$0xf]
  %v15 = vld [vmem:[%s0 + $0x4] sm:$0xf]
  %v16 = vld [vmem:[%s0 + $0x8] sm:$0xf]
  %v17 = vld [vmem:[%s0 + $0xc] sm:$0xf]
  %v18 = vld [vmem:[%s1] sm:$0xf]
  %v19 = vld [vmem:[%s1 + $0x4] sm:$0xf]
  %v20 = vld [vmem:[%s1 + $0x8] sm:$0xf]
  %v21 = vld [vmem:[%s1 + $0xc] sm:$0xf]
  %v22 = vld [vmem:[%s1 + $0x10] sm:$0xf]
  %v23 = vld [vmem:[%s1 + $0x14] sm:$0xf]
  %v24 = vld [vmem:[%s1 + $0x18] sm:$0xf]
  %v25 = vld [vmem:[%s1 + $0x1c] sm:$0xf]
  %v30 = vunpack.c.l.b16 %v14
  %v31 = vunpack.c.l.b16 %v15
  %v32 = vunpack.c.l.b16 %v16
  %v33 = vunpack.c.l.b16 %v17
  %v34 = vpack.c.b16 %v31, %v30
  %v35 = vpack.c.b16 %v33, %v32
  %v44 = vunpack.c.l.b16 %v18
  %v45 = vunpack.c.l.b16 %v19
  %v46 = vunpack.c.l.b16 %v20
  %v47 = vunpack.c.l.b16 %v21
  %v48 = vunpack.c.l.b16 %v22
  %v49 = vunpack.c.l.b16 %v23
  %v50 = vunpack.c.l.b16 %v24
  %v51 = vunpack.c.l.b16 %v25
  %v52 = vpack.c.b16 %v45, %v44
  %v53 = vpack.c.b16 %v47, %v46
  %v54 = vpack.c.b16 %v49, %v48
  %v55 = vpack.c.b16 %v51, %v50
  %vm60 = vcmask 523264
  %v62 = vsel %vm60, %v34, 0
  %v65 = vsel %vm60, %v35, 0
  %67 = vmatprep.subr.bf16.mxu0 0
  %68 = vmatpush1.bf16.msra.mxu0 0
  %69 = vmatprep.subr.bf16.mxu0 0
  %70 = vmatpush1.bf16.msra.mxu0 0
  %71 = vmatprep.subr.bf16.mxu0 0
  %72 = vmatpush1.bf16.msra.mxu0 0
  %73 = vmatprep.subr.bf16.mxu0 0
  %74 = vmatpush1.bf16.msra.mxu0 0
  %75 = vmatprep.subr.bf16.mxu0 0
  %76 = vmatpush1.bf16.msra.mxu0 %v55
  %77 = vmatprep.subr.bf16.mxu0 0
  %78 = vmatpush1.bf16.msra.mxu0 %v54
  %79 = vmatprep.subr.bf16.mxu0 0
  %80 = vmatpush1.bf16.msra.mxu0 %v53
  %81 = vmatprep.subr.bf16.mxu0 0
  %82 = vmatpush1.bf16.msra.mxu0 %v52
  %83 = vmatprep.subr.bf16.mxu0 0
  %84 = vmatpush2.bf16.msra.mxu0 0
  %85 = vmatprep.subr.bf16.mxu0 0
  %86 = vmatpush2.bf16.msra.mxu0 0
  %87 = vmatprep.subr.bf16.mxu0 0
  %88 = vmatpush2.bf16.msra.mxu0 0
  %89 = vmatprep.subr.bf16.mxu0 0
  %90 = vmatpush2.bf16.msra.mxu0 0
  %91 = vmatprep.subr.bf16.mxu0 0
  %92 = vmatpush2.bf16.msra.mxu0 0
  %93 = vmatprep.subr.bf16.mxu0 0
  %94 = vmatpush2.bf16.msra.mxu0 0
  %95 = vmatprep.subr.bf16.mxu0 0
  %96 = vmatpush2.bf16.msra.mxu0 0
  %97 = vmatprep.subr.bf16.mxu0 0
  %98 = vmatpush2.bf16.msra.mxu0 0
  %99 = vmatprep.mubr.bf16.mxu0 0
  %100 = vmatmul.mubr.bf16.gmra.mxu0 %v62
  %v101 = vpop.f32.mrf.mxu0
  %v102 = vadd.f32 0.0, %v101
  %v103 = vpop.f32.mrf.mxu0
  %v104 = vpop.f32.mrf.mxu0
  %v105 = vadd.f32 0.0, %v104
  %v106 = vpop.f32.mrf.mxu0
  %107 = vmatprep.mubr.bf16.mxu0 0
  %108 = vmatmul.mubr.bf16.gmra.mxu0 %v65
  %v109 = vpop.f32.mrf.mxu0
  %v110 = vadd.f32 0.0, %v109
  %v111 = vpop.f32.mrf.mxu0
  %v112 = vpop.f32.mrf.mxu0
  %v113 = vadd.f32 0.0, %v112
  %v114 = vpop.f32.mrf.mxu0
  %115 = vdwg.mxu0
  %v116 = vpack.c.bf16 %v105, %v102
  %v117 = vpack.c.bf16 %v113, %v110
  %v120 = vunpack.c.l.b16 %v116
  %v121 = vunpack.c.h.b16 %v116
  %v122 = vunpack.c.l.b16 %v117
  %v123 = vunpack.c.h.b16 %v117
  %v124 = vpack.c.b16 %v120, %v120
  %v125 = vpack.c.b16 %v121, %v121
  %v126 = vpack.c.b16 %v122, %v122
  %v127 = vpack.c.b16 %v123, %v123
  %132 = vst [vmem:[%s2] sm:$0xf] %v124
  %133 = vst [vmem:[%s2 + $0x4] sm:$0xf] %v125
  %134 = vst [vmem:[%s2 + $0x8] sm:$0xf] %v126
  %135 = vst [vmem:[%s2 + $0xc] sm:$0xf] %v127
  %v136 = vadd.f32 %v102, %v105
  %v137 = vadd.f32 %v136, %v110
  %v138 = vadd.f32 %v137, %v113
  %v139 = vrot.slane %v138, 4
  %v140 = vadd.f32 %v138, %v139
  %v141 = vrot.slane %v140, 2
  %v142 = vadd.f32 %v140, %v141
  %v143 = vrot.slane %v142, 1
  %v144 = vadd.f32 %v142, %v143
  %v145 = vmul.f32 %v102, %v102
  %v146 = vmul.f32 %v105, %v105
  %v147 = vmul.f32 %v110, %v110
  %v148 = vmul.f32 %v113, %v113
  %v149 = vadd.f32 %v145, %v146
  %v150 = vadd.f32 %v149, %v147
  %v151 = vadd.f32 %v150, %v148
  %v152 = vrot.slane %v151, 4
  %v153 = vadd.f32 %v151, %v152
  %v154 = vrot.slane %v153, 2
  %v155 = vadd.f32 %v153, %v154
  %v156 = vrot.slane %v155, 1
  %v157 = vadd.f32 %v155, %v156
  %vm158 = vcmask 1040384
  %v159 = vsel %vm158, %v144, %v157
  %160 = vst [vmem:[%s3] sm:$0x3] %v159
  // Predicated region
  $region10: #{fwd.4} parent=0 // pred_check
    _
  $region11: #{fwd.4} parent=0 // pred_check_branch
    %162 = sbr.rel (0) target = $region13
  $region12: #{fwd.4} parent=0 // pred_region
    _
  $region13: #{fwd.4} parent=0 // pred_fallthru
    _
  // Predicated region
  $region14: #{fwd.4} parent=0 // pred_check
    _
  $region15: #{fwd.4} parent=0 // pred_check_branch
    %164 = sbr.rel (0) target = $region17
  $region16: #{fwd.4} parent=0 // pred_region
    _
  $region17: #{fwd.4} parent=0 // pred_fallthru
    _
  // Predicated region
  $region18: #{fwd.4} parent=0 // pred_check
    _
  $region19: #{fwd.4} parent=0 // pred_check_branch
    %166 = sbr.rel (0) target = $region21
  $region20: #{fwd.4} parent=0 // pred_region
    _
  $region21: #{fwd.4} parent=0 // pred_fallthru
    _
  // Predicated region
  $region22: #{fwd.4} parent=0 // pred_check
    _
  $region23: #{fwd.4} parent=0 // pred_check_branch
    %168 = sbr.rel (0) target = $region25
  $region24: #{fwd.4} parent=0 // pred_region
    _
  $region25: #{fwd.4} parent=0 // pred_fallthru
    _

// kernel: fwd.5
$region0: #{fwd.5}
  #allocation0 [shape = 'u32[]', space=smem, size = 0x4, offset = 0x4, fixed_abs, tag = 'smem constant byte address 0x4 - core index']
  #allocation1 [shape = 'u32[144,128]{1,0:T(1,128)}', space=vmem, size = 0x12000, scoped, tag = 'internal scratch']
  %s0 = inlined_call_operand.vmem [shape: bf16[32,128], index: 0, kind: input, shape index: {}]
  %s1 = inlined_call_operand.vmem [shape: f32[1,128], index: 1, kind: input, shape index: {}]
  %s2 = inlined_call_operand.vmem [shape: f32[1,128], index: 2, kind: input, shape index: {}]
  %s3 = inlined_call_operand.hbm [shape: f32[32,128], index: 3, kind: output, shape index: {}]
  %s4 = sld [smem:[#allocation0]]
  $region22: #{fwd.5} parent=0
    _
  %s6 = ssub.s32 1, %s4
  %s7 = scalar_select 0, %s6, %s4
  $region1: #{fwd.5} parent=0
    #allocation2 [shape = 'u8[16384]{0}', space=vmem, size = 0x4000, scoped, tag = 'output window, operand 0, single buffered']
    #allocation3 [shape = 's32[1]{0}', space=sflag, size = 0x4, scoped, tag = 'scoped memory for fwd.5']
    %8 = vsyncpa [#allocation3], 0
    // Predicated region
    $region2: #{fwd.5} parent=1 // pred_check
      _
    $region3: #{fwd.5} parent=1 // pred_check_branch
      %10 = sbr.rel (0) target = $region5
    $region4: #{fwd.5} parent=1 // pred_region
      _
    $region5: #{fwd.5} parent=1 // pred_fallthru
      _
    // Predicated region
    $region6: #{fwd.5} parent=1 // pred_check
      _
    $region7: #{fwd.5} parent=1 // pred_check_branch
      %12 = sbr.rel (0) target = $region9
    $region8: #{fwd.5} parent=1 // pred_region
      _
    $region9: #{fwd.5} parent=1 // pred_fallthru
      _
    // Predicated region
    $region10: #{fwd.5} parent=1 // pred_check
      _
    $region11: #{fwd.5} parent=1 // pred_check_branch
      %14 = sbr.rel (0) target = $region13
    $region12: #{fwd.5} parent=1 // pred_region
      _
    $region13: #{fwd.5} parent=1 // pred_fallthru
      _
    %v15 = vld [vmem:[%s0] sm:$0xf]
    %v16 = vld [vmem:[%s0 + $0x4] sm:$0xf]
    %v17 = vld [vmem:[%s0 + $0x8] sm:$0xf]
    %v18 = vld [vmem:[%s0 + $0xc] sm:$0xf]
    %v19 = vunpack.c.l.bf16 %v15
    %v20 = vunpack.c.l.bf16 %v16
    %v21 = vunpack.c.l.bf16 %v17
    %v22 = vunpack.c.l.bf16 %v18
    %v23 = vld [vmem:[%s1] sm:$0x1]
    %v25 = vlaneseq
    %v26 = vshrl.u32 %v25, 7
    %v27 = vsub.s32 0, %v26
    %v28 = vrot.slane %v23, %v27
    %v30 = vmul.f32 %v19, %v28
    %v31 = vmul.f32 %v20, %v28
    %v32 = vmul.f32 %v21, %v28
    %v33 = vmul.f32 %v22, %v28
    %v34 = vld [vmem:[%s2] sm:$0x1]
    %v36 = vlaneseq
    %v37 = vshrl.u32 %v36, 7
    %v38 = vsub.s32 0, %v37
    %v39 = vrot.slane %v34, %v38
    %v41 = vadd.f32 %v30, %v39
    %v42 = vadd.f32 %v31, %v39
    %v43 = vadd.f32 %v32, %v39
    %v44 = vadd.f32 %v33, %v39
    %45 = vst [vmem:[#allocation2] sm:$0xff] %v41
    %46 = vst [vmem:[#allocation2 + $0x8] sm:$0xff] %v42
    %47 = vst [vmem:[#allocation2 + $0x10] sm:$0xff] %v43
    %48 = vst [vmem:[#allocation2 + $0x18] sm:$0xff] %v44
    // Predicated region
    $region14: #{fwd.5} parent=1 // pred_check
      _
    $region15: #{fwd.5} parent=1 // pred_check_branch
      %50 = sbr.rel (0) target = $region17
    $region16: #{fwd.5} parent=1 // pred_region
      %s52 = ssub.s32 512, 512
      %53 = vsyncadd [#allocation3], %s52
      %s54 = sshll.u32 [#allocation2], 4
      %s55 = int_to_ptr.vmem [resolvable:$true] %s54
      %60 = dma.vmem_to_hbm [thread:$0]  %s55, 512, %s3, [#allocation3], 128, 128, 8
    $region17: #{fwd.5} parent=1 // pred_fallthru
      _
    // Predicated region
    $region18: #{fwd.5} parent=1 // pred_check
      _
    $region19: #{fwd.5} parent=1 // pred_check_branch
      %62 = sbr.rel (0) target = $region21
    $region20: #{fwd.5} parent=1 // pred_region
      %63 = dma.done [#allocation3], 512
    $region21: #{fwd.5} parent=1 // pred_fallthru
      _
    %64 = vsyncpa [#allocation3], 1

</llo_original>
